<compile_context>
chip_gen: v5e
topology: v5e:2x2
jax: 0.10.0
libtpu: 0.0.40
codegen_flags: <defaults>
</compile_context>

<pallas_src>
import functools
import math

import numpy as np
import jax
import jax.numpy as jnp
from jax import lax
from jax.experimental import pallas as pl
from jax.experimental.pallas import tpu as pltpu


# ----------------------------------------------------------------------------
# Log-sparse mask (faithful port of logsparseAttention.row_mask / log_mask)
# ----------------------------------------------------------------------------
def _row_mask(index, sub_len, win_len):
    log_l = math.ceil(np.log2(sub_len))
    mask = np.zeros(win_len, dtype=np.float32)
    if (win_len // sub_len) * 2 * log_l > index:
        mask[: index + 1] = 1.0
    else:
        while index >= 0:
            if index - log_l + 1 < 0:
                mask[:index] = 1.0
                break
            mask[index - log_l + 1 : index + 1] = 1.0
            for i in range(0, log_l):
                new_index = index - log_l + 1 - 2 ** i
                if index - new_index <= sub_len and new_index >= 0:
                    mask[new_index] = 1.0
            index -= sub_len
    return mask


def log_mask(win_len, sub_len):
    mask = np.zeros((win_len, win_len), dtype=np.float32)
    for i in range(win_len):
        mask[i] = _row_mask(i, sub_len, win_len)
    return mask  # (L, L), 1.0 = attend


# ----------------------------------------------------------------------------
# Tiling helpers
# ----------------------------------------------------------------------------
def _round_up(x, m):
    return ((x + m - 1) // m) * m


def _pick_seq_tile(L, target):
    """Sequence tile: multiple of 8; if there is more than one tile along L it must also
    be lane (128) aligned so the (tile, tile) bias block satisfies the (8,128) rule."""
    t = max(8, min(target, _round_up(L, 8)))
    t = _round_up(t, 8)
    if _round_up(L, t) != t:           # multi-tile -> bias block's lane dim must be 128-aligned
        t = _round_up(t, 128)
    return t


def _pick_head_block(H, t, D, itemsize, budget_bytes=8 << 20):
    """Largest divisor of H whose per-step working set fits a conservative VMEM budget."""
    for hb in range(H, 0, -1):
        if H % hb:
            continue
        tiles = 4 * 2 * hb * t * D * itemsize      # q/k/v/out tiles, double-buffered
        scratch = hb * t * (D + 2) * 4             # acc + m + l (f32)
        scores = t * t * 4                         # per-head score tile (f32)
        bias = 2 * t * t * 4                       # bias tile, double-buffered
        if tiles + scratch + scores + bias <= budget_bytes:
            return hb
    return 1


# ----------------------------------------------------------------------------
# Kernel: one (head-group, q-tile) flash accumulation over its live kv tiles
# ----------------------------------------------------------------------------
def _logsparse_flash_kernel(
    kv_idx_ref,   # SMEM (NQ, S) int32 : live kv-tile index per (q-tile, step)
    kv_cnt_ref,   # SMEM (NQ,)  int32 : number of live kv tiles per q-tile
    q_ref,        # VMEM (1, Hb, TQ, D)
    k_ref,        # VMEM (1, Hb, TK, D)
    v_ref,        # VMEM (1, Hb, TK, D)
    bias_ref,     # VMEM (TQ, TK) f32 additive mask bias (0 attend / -1e9 blocked)
    o_ref,        # VMEM (1, Hb, TQ, D)
    m_sc,         # VMEM (Hb, TQ, 1) f32 running max
    l_sc,         # VMEM (Hb, TQ, 1) f32 running denominator
    acc_sc,       # VMEM (Hb, TQ, D) f32 running numerator
    *,
    hb,
    scale_inv,
):
    qi = pl.program_id(1)
    s = pl.program_id(2)

    @pl.when(s == 0)
    def _init():
        m_sc[...] = jnp.full_like(m_sc, -jnp.inf)
        l_sc[...] = jnp.zeros_like(l_sc)
        acc_sc[...] = jnp.zeros_like(acc_sc)

    @pl.when(s < kv_cnt_ref[qi])          # skip compute on dead / padded kv steps
    def _step():
        bias = bias_ref[...]              # (TQ, TK) f32
        for h in range(hb):               # static unroll over the head block
            q = q_ref[0, h]               # (TQ, D), native dtype
            if scale_inv is not None:
                q = q * scale_inv         # fold 1/sqrt(D) into Q (L*D muls, not L^2)
            k = k_ref[0, h]               # (TK, D)
            v = v_ref[0, h]               # (TK, D)
            # Q @ K^T contracting the last dims directly (no transpose), f32 accumulate.
            scores = lax.dot_general(
                q, k, (((1,), (1,)), ((), ())),
                preferred_element_type=jnp.float32,
            )
            scores = scores + bias
            m_prev = m_sc[h]                                            # (TQ, 1)
            m_new = jnp.maximum(m_prev, jnp.max(scores, axis=-1, keepdims=True))
            alpha = jnp.exp(m_prev - m_new)
            p = jnp.exp(scores - m_new)
            l_sc[h] = alpha * l_sc[h] + jnp.sum(p, axis=-1, keepdims=True)
            acc_sc[h] = alpha * acc_sc[h] + jnp.dot(
                p.astype(v.dtype), v, preferred_element_type=jnp.float32
            )
            m_sc[h] = m_new

    @pl.when(s == pl.num_programs(2) - 1)
    def _finalize():
        inv = pl.reciprocal(l_sc[...], approx=True)          # EUP slot
        o_ref[0] = (acc_sc[...] * inv).astype(o_ref.dtype)


# ----------------------------------------------------------------------------
# Wrapper
# ----------------------------------------------------------------------------
def logsparse_attention(
    queries, keys, values, attn_mask=None, *,
    sub_len=5, scale=None, sparse=True, block_size=256,
):
    """Forward pass of logsparseAttention. Returns (attn, None) with attn of shape (B, H, L, D)."""
    del attn_mask  # unused by the reference module's forward
    B, L, H, D = queries.shape
    out_dtype = queries.dtype

    t = _pick_seq_tile(L, block_size)
    Lp = _round_up(L, t)
    nq = Lp // t
    hb = _pick_head_block(H, t, D, queries.dtype.itemsize)
    hg = H // hb

    # ---- mask / additive bias / block-sparsity tables (numpy, trace-time constants) ----
    mask = log_mask(L, sub_len) if sparse else np.tril(np.ones((L, L), dtype=np.float32))
    mask_p = np.zeros((Lp, Lp), dtype=np.float32)
    mask_p[:L, :L] = mask
    bias = ((mask_p - 1.0) * 1e9).astype(np.float32)        # 0 where attended, -1e9 otherwise

    live = mask_p.reshape(nq, t, nq, t).max(axis=(1, 3)) > 0.0      # (nq, nq) block-live table
    cnt = live.sum(axis=1).astype(np.int32)                          # live kv tiles per q tile
    n_steps = max(int(cnt.max()), 1)
    kv_idx = np.zeros((nq, n_steps), dtype=np.int32)
    for i in range(nq):
        ids = np.nonzero(live[i])[0]
        if ids.size:
            kv_idx[i, : ids.size] = ids
            kv_idx[i, ids.size:] = ids[-1]     # repeat last live tile -> no extra DMA on pad steps

    # ---- layout: (B, L, H, D) -> (B*hg, hb, Lp, D); keep native dtype (no f32 upcast) ----
    # TODO(synk): the head/seq transpose is still an XLA op; gathering heads straight from the
    # native (B, L, H, D) layout needs an (8,128)-legal head block and is not done here.
    def to_heads(x):
        x = jnp.transpose(x, (0, 2, 1, 3))                  # (B, H, L, D)
        if Lp != L:
            x = jnp.pad(x, ((0, 0), (0, 0), (0, Lp - L), (0, 0)))
        return x.reshape(B * hg, hb, Lp, D)

    qh, kh, vh = to_heads(queries), to_heads(keys), to_heads(values)

    scale_inv = (1.0 / math.sqrt(D)) if scale else None
    kernel = functools.partial(_logsparse_flash_kernel, hb=hb, scale_inv=scale_inv)

    qkv_block = (1, hb, t, D)
    grid_spec = pltpu.PrefetchScalarGridSpec(
        num_scalar_prefetch=2,
        grid=(B * hg, nq, n_steps),
        in_specs=[
            pl.BlockSpec(qkv_block, lambda g, qi, s, kvi, kvc: (g, 0, qi, 0)),          # Q
            pl.BlockSpec(qkv_block, lambda g, qi, s, kvi, kvc: (g, 0, kvi[qi, s], 0)),  # K
            pl.BlockSpec(qkv_block, lambda g, qi, s, kvi, kvc: (g, 0, kvi[qi, s], 0)),  # V
            pl.BlockSpec((t, t), lambda g, qi, s, kvi, kvc: (qi, kvi[qi, s])),          # bias
        ],
        out_specs=pl.BlockSpec(qkv_block, lambda g, qi, s, kvi, kvc: (g, 0, qi, 0)),
        scratch_shapes=[
            pltpu.VMEM((hb, t, 1), jnp.float32),   # running max  m
            pltpu.VMEM((hb, t, 1), jnp.float32),   # running sum  l
            pltpu.VMEM((hb, t, D), jnp.float32),   # running acc  (numerator)
        ],
    )

    out = pl.pallas_call(
        kernel,
        out_shape=jax.ShapeDtypeStruct((B * hg, hb, Lp, D), out_dtype),
        grid_spec=grid_spec,
        compiler_params=pltpu.CompilerParams(
            dimension_semantics=("parallel", "parallel", "arbitrary")),
    )(jnp.asarray(kv_idx), jnp.asarray(cnt), qh, kh, vh, jnp.asarray(bias))

    out = out.reshape(B, H, Lp, D)[:, :, :L, :]
    # TODO(synk): attn_dropout (p=0.1) is omitted — matches eval-mode forward only.
    return out, None


# ----------------------------------------------------------------------------
# Pure-JAX reference (mirrors the PyTorch math) for correctness checking
# ----------------------------------------------------------------------------
def _reference(queries, keys, values, *, sub_len=5, scale=None, sparse=True):
    B, L, H, D = queries.shape
    q = jnp.transpose(queries, (0, 2, 1, 3)).astype(jnp.float32)   # (B,H,L,D)
    k = jnp.transpose(keys, (0, 2, 3, 1)).astype(jnp.float32)      # (B,H,D,L)
    v = jnp.transpose(values, (0, 2, 1, 3)).astype(jnp.float32)    # (B,H,L,D)
    pre = jnp.matmul(q, k)
    if scale:
        pre = pre / math.sqrt(D)
    m = jnp.asarray(
        log_mask(L, sub_len) if sparse else np.tril(np.ones((L, L), dtype=np.float32)),
        jnp.float32)[None, None]
    pre = pre * m + (-1e9) * (1.0 - m)
    p = jax.nn.softmax(pre, axis=-1)
    return jnp.matmul(p, v)


if __name__ == "__main__":
    # Full-precision f32 matmuls so the kernel-vs-reference comparison is tight.
    jax.config.update("jax_default_matmul_precision", "highest")

    def check(B, L, H, D, *, sub_len, scale, sparse, block_size, seed):
        ks = jax.random.split(jax.random.PRNGKey(seed), 3)
        q = jax.random.normal(ks[0], (B, L, H, D), dtype=jnp.float32)
        k = jax.random.normal(ks[1], (B, L, H, D), dtype=jnp.float32)
        v = jax.random.normal(ks[2], (B, L, H, D), dtype=jnp.float32)
        out, none_attn = logsparse_attention(
            q, k, v, None, sub_len=sub_len, scale=scale, sparse=sparse,
            block_size=block_size)
        out = jax.block_until_ready(out)
        assert none_attn is None
        assert out.shape == (B, H, L, D)
        ref = _reference(q, k, v, sub_len=sub_len, scale=scale, sparse=sparse)
        # Tolerance covers the approximate (EUP) reciprocal in the softmax normalization.
        np.testing.assert_allclose(np.asarray(out), np.asarray(ref), rtol=5e-3, atol=5e-3)

    # Small shape consistent with the module's forward: (batch, seq, heads, head_dim).
    check(2, 8, 2, 16, sub_len=5, scale=None, sparse=True, block_size=256, seed=0)
    # Multi-tile path: exercises online softmax across kv steps, block-sparse tile
    # skipping via scalar prefetch, and the folded 1/sqrt(D) scaling.
    check(2, 256, 2, 16, sub_len=5, scale=True, sparse=True, block_size=128, seed=1)

    print("KERNEL_OK")
</pallas_src>

<mosaic_0001>
module attributes {stable_mosaic.version = 11 : i64} {
  func.func @_logsparse_flash_kernel(%arg0: i32, %arg1: i32, %arg2: i32, %arg3: memref<1x1xi32, #tpu.memory_space<smem>>, %arg4: memref<1xi32, #tpu.memory_space<smem>>, %arg5: memref<1x2x8x16xf32, #tpu.memory_space<vmem>>, %arg6: memref<1x2x8x16xf32, #tpu.memory_space<vmem>>, %arg7: memref<1x2x8x16xf32, #tpu.memory_space<vmem>>, %arg8: memref<8x8xf32, #tpu.memory_space<vmem>>, %arg9: memref<1x2x8x16xf32, #tpu.memory_space<vmem>>, %arg10: memref<2x8x1xf32, #tpu.memory_space<vmem>>, %arg11: memref<2x8x1xf32, #tpu.memory_space<vmem>>, %arg12: memref<2x8x16xf32, #tpu.memory_space<vmem>>) attributes {dimension_semantics = [#tpu.dimension_semantics<parallel>, #tpu.dimension_semantics<parallel>, #tpu.dimension_semantics<arbitrary>], iteration_bounds = array<i64: 2, 1, 1>, scalar_prefetch = 2 : i64, scratch_operands = 3 : i64, tpu.core_type = #tpu.core_type<tc>, window_params = [{transform_indices = @transform_0, window_bounds = array<i64: 1, 2, 8, 16>}, {transform_indices = @transform_1, window_bounds = array<i64: 1, 2, 8, 16>}, {transform_indices = @transform_2, window_bounds = array<i64: 1, 2, 8, 16>}, {transform_indices = @transform_3, window_bounds = array<i64: 8, 8>}, {transform_indices = @transform_4, window_bounds = array<i64: 1, 2, 8, 16>}]} {
    %c0_i32 = arith.constant 0 : i32
    %0 = arith.cmpi eq, %arg2, %c0_i32 : i32
    %1 = arith.extui %0 : i1 to i32
    %c0_i32_0 = arith.constant 0 : i32
    %2 = arith.cmpi ne, %1, %c0_i32_0 : i32
    scf.if %2 {
      %cst = arith.constant 0xFF800000 : f32
      %11 = vector.broadcast %cst : f32 to vector<2x8x1xf32>
      %c0 = arith.constant 0 : index
      %c0_4 = arith.constant 0 : index
      %c0_5 = arith.constant 0 : index
      %12 = vector.load %arg10[%c0, %c0_4, %c0_5] : memref<2x8x1xf32, #tpu.memory_space<vmem>>, vector<2x8x1xf32>
      tpu.vector_store %arg10[%c0, %c0_4, %c0_5], %11 {strides = array<i32>} : memref<2x8x1xf32, #tpu.memory_space<vmem>>, vector<2x8x1xf32>,
      %cst_6 = arith.constant 0.000000e+00 : f32
      %13 = vector.broadcast %cst_6 : f32 to vector<2x8x1xf32>
      %c0_7 = arith.constant 0 : index
      %c0_8 = arith.constant 0 : index
      %c0_9 = arith.constant 0 : index
      %14 = vector.load %arg11[%c0_7, %c0_8, %c0_9] : memref<2x8x1xf32, #tpu.memory_space<vmem>>, vector<2x8x1xf32>
      tpu.vector_store %arg11[%c0_7, %c0_8, %c0_9], %13 {strides = array<i32>} : memref<2x8x1xf32, #tpu.memory_space<vmem>>, vector<2x8x1xf32>,
      %cst_10 = arith.constant 0.000000e+00 : f32
      %15 = vector.broadcast %cst_10 : f32 to vector<2x8x16xf32>
      %c0_11 = arith.constant 0 : index
      %c0_12 = arith.constant 0 : index
      %c0_13 = arith.constant 0 : index
      %16 = vector.load %arg12[%c0_11, %c0_12, %c0_13] : memref<2x8x16xf32, #tpu.memory_space<vmem>>, vector<2x8x16xf32>
      tpu.vector_store %arg12[%c0_11, %c0_12, %c0_13], %15 {strides = array<i32>} : memref<2x8x16xf32, #tpu.memory_space<vmem>>, vector<2x8x16xf32>,
    } else {
    }
    %3 = arith.index_cast %arg1 : i32 to index
    %4 = memref.load %arg4[%3] : memref<1xi32, #tpu.memory_space<smem>>
    %5 = arith.cmpi slt, %arg2, %4 : i32
    %6 = arith.extui %5 : i1 to i32
    %c0_i32_1 = arith.constant 0 : i32
    %7 = arith.cmpi ne, %6, %c0_i32_1 : i32
    scf.if %7 {
      %c0 = arith.constant 0 : index
      %c0_4 = arith.constant 0 : index
      %11 = vector.load %arg8[%c0, %c0_4] : memref<8x8xf32, #tpu.memory_space<vmem>>, vector<8x8xf32>
      %c0_5 = arith.constant 0 : index
      %c0_6 = arith.constant 0 : index
      %c0_7 = arith.constant 0 : index
      %c0_8 = arith.constant 0 : index
      %12 = vector.load %arg5[%c0_5, %c0_6, %c0_7, %c0_8] : memref<1x2x8x16xf32, #tpu.memory_space<vmem>>, vector<1x1x8x16xf32>
      %13 = vector.shape_cast %12 : vector<1x1x8x16xf32> to vector<8x16xf32>
      %c0_9 = arith.constant 0 : index
      %c0_10 = arith.constant 0 : index
      %c0_11 = arith.constant 0 : index
      %c0_12 = arith.constant 0 : index
      %14 = vector.load %arg6[%c0_9, %c0_10, %c0_11, %c0_12] : memref<1x2x8x16xf32, #tpu.memory_space<vmem>>, vector<1x1x8x16xf32>
      %15 = vector.shape_cast %14 : vector<1x1x8x16xf32> to vector<8x16xf32>
      %c0_13 = arith.constant 0 : index
      %c0_14 = arith.constant 0 : index
      %c0_15 = arith.constant 0 : index
      %c0_16 = arith.constant 0 : index
      %16 = vector.load %arg7[%c0_13, %c0_14, %c0_15, %c0_16] : memref<1x2x8x16xf32, #tpu.memory_space<vmem>>, vector<1x1x8x16xf32>
      %17 = vector.shape_cast %16 : vector<1x1x8x16xf32> to vector<8x16xf32>
      %cst = arith.constant dense<0.000000e+00> : vector<8x8xf32>
      %18 = tpu.matmul %13, %15, %cst {dimension_numbers = #tpu.dot_dimension_numbers<[1], [1], [0], [0], [0, 0, 1, 0], [], []>, precision = #tpu.contract_precision<fp32>} : vector<8x16xf32>, vector<8x16xf32>, vector<8x8xf32> -> vector<8x8xf32>
      %19 = arith.addf %18, %11 : vector<8x8xf32>
      %c0_17 = arith.constant 0 : index
      %c0_18 = arith.constant 0 : index
      %c0_19 = arith.constant 0 : index
      %20 = vector.load %arg10[%c0_17, %c0_18, %c0_19] : memref<2x8x1xf32, #tpu.memory_space<vmem>>, vector<1x8x1xf32>
      %21 = vector.shape_cast %20 : vector<1x8x1xf32> to vector<8x1xf32>
      %cst_20 = arith.constant dense<0xFF800000> : vector<8xf32>
      %22 = vector.multi_reduction <maximumf>, %19, %cst_20 [1] : vector<8x8xf32> to vector<8xf32>
      %23 = vector.shape_cast %22 : vector<8xf32> to vector<8x1xf32>
      %24 = arith.maximumf %21, %23 : vector<8x1xf32>
      %25 = arith.subf %21, %24 : vector<8x1xf32>
      %26 = math.exp %25 : vector<8x1xf32>
      %27 = vector.broadcast %24 : vector<8x1xf32> to vector<8x8xf32>
      %28 = arith.subf %19, %27 : vector<8x8xf32>
      %29 = math.exp %28 : vector<8x8xf32>
      %c0_21 = arith.constant 0 : index
      %c0_22 = arith.constant 0 : index
      %c0_23 = arith.constant 0 : index
      %30 = vector.load %arg11[%c0_21, %c0_22, %c0_23] : memref<2x8x1xf32, #tpu.memory_space<vmem>>, vector<1x8x1xf32>
      %31 = vector.shape_cast %30 : vector<1x8x1xf32> to vector<8x1xf32>
      %32 = arith.mulf %26, %31 : vector<8x1xf32>
      %cst_24 = arith.constant dense<0.000000e+00> : vector<8xf32>
      %33 = vector.multi_reduction <add>, %29, %cst_24 [1] : vector<8x8xf32> to vector<8xf32>
      %34 = vector.shape_cast %33 : vector<8xf32> to vector<8x1xf32>
      %35 = arith.addf %32, %34 : vector<8x1xf32>
      %c0_25 = arith.constant 0 : index
      %c0_26 = arith.constant 0 : index
      %c0_27 = arith.constant 0 : index
      %36 = vector.load %arg11[%c0_25, %c0_26, %c0_27] : memref<2x8x1xf32, #tpu.memory_space<vmem>>, vector<1x8x1xf32>
      %37 = vector.shape_cast %36 : vector<1x8x1xf32> to vector<8x1xf32>
      %38 = vector.shape_cast %35 : vector<8x1xf32> to vector<1x8x1xf32>
      tpu.vector_store %arg11[%c0_25, %c0_26, %c0_27], %38 {strides = array<i32>} : memref<2x8x1xf32, #tpu.memory_space<vmem>>, vector<1x8x1xf32>,
      %c0_28 = arith.constant 0 : index
      %c0_29 = arith.constant 0 : index
      %c0_30 = arith.constant 0 : index
      %39 = vector.load %arg12[%c0_28, %c0_29, %c0_30] : memref<2x8x16xf32, #tpu.memory_space<vmem>>, vector<1x8x16xf32>
      %40 = vector.shape_cast %39 : vector<1x8x16xf32> to vector<8x16xf32>
      %41 = vector.broadcast %26 : vector<8x1xf32> to vector<8x16xf32>
      %42 = arith.mulf %41, %40 : vector<8x16xf32>
      %cst_31 = arith.constant dense<0.000000e+00> : vector<8x16xf32>
      %43 = tpu.matmul %29, %17, %cst_31 {dimension_numbers = #tpu.dot_dimension_numbers<[1], [0], [0], [1], [0, 0, 1, 1], [], []>, precision = #tpu.contract_precision<fp32>} : vector<8x8xf32>, vector<8x16xf32>, vector<8x16xf32> -> vector<8x16xf32>
      %44 = arith.addf %42, %43 : vector<8x16xf32>
      %c0_32 = arith.constant 0 : index
      %c0_33 = arith.constant 0 : index
      %c0_34 = arith.constant 0 : index
      %45 = vector.load %arg12[%c0_32, %c0_33, %c0_34] : memref<2x8x16xf32, #tpu.memory_space<vmem>>, vector<1x8x16xf32>
      %46 = vector.shape_cast %45 : vector<1x8x16xf32> to vector<8x16xf32>
      %47 = vector.shape_cast %44 : vector<8x16xf32> to vector<1x8x16xf32>
      tpu.vector_store %arg12[%c0_32, %c0_33, %c0_34], %47 {strides = array<i32>} : memref<2x8x16xf32, #tpu.memory_space<vmem>>, vector<1x8x16xf32>,
      %c0_35 = arith.constant 0 : index
      %c0_36 = arith.constant 0 : index
      %c0_37 = arith.constant 0 : index
      %48 = vector.load %arg10[%c0_35, %c0_36, %c0_37] : memref<2x8x1xf32, #tpu.memory_space<vmem>>, vector<1x8x1xf32>
      %49 = vector.shape_cast %48 : vector<1x8x1xf32> to vector<8x1xf32>
      %50 = vector.shape_cast %24 : vector<8x1xf32> to vector<1x8x1xf32>
      tpu.vector_store %arg10[%c0_35, %c0_36, %c0_37], %50 {strides = array<i32>} : memref<2x8x1xf32, #tpu.memory_space<vmem>>, vector<1x8x1xf32>,
      %c0_38 = arith.constant 0 : index
      %c1 = arith.constant 1 : index
      %c0_39 = arith.constant 0 : index
      %c0_40 = arith.constant 0 : index
      %51 = vector.load %arg5[%c0_38, %c1, %c0_39, %c0_40] : memref<1x2x8x16xf32, #tpu.memory_space<vmem>>, vector<1x1x8x16xf32>
      %52 = vector.shape_cast %51 : vector<1x1x8x16xf32> to vector<8x16xf32>
      %c0_41 = arith.constant 0 : index
      %c1_42 = arith.constant 1 : index
      %c0_43 = arith.constant 0 : index
      %c0_44 = arith.constant 0 : index
      %53 = vector.load %arg6[%c0_41, %c1_42, %c0_43, %c0_44] : memref<1x2x8x16xf32, #tpu.memory_space<vmem>>, vector<1x1x8x16xf32>
      %54 = vector.shape_cast %53 : vector<1x1x8x16xf32> to vector<8x16xf32>
      %c0_45 = arith.constant 0 : index
      %c1_46 = arith.constant 1 : index
      %c0_47 = arith.constant 0 : index
      %c0_48 = arith.constant 0 : index
      %55 = vector.load %arg7[%c0_45, %c1_46, %c0_47, %c0_48] : memref<1x2x8x16xf32, #tpu.memory_space<vmem>>, vector<1x1x8x16xf32>
      %56 = vector.shape_cast %55 : vector<1x1x8x16xf32> to vector<8x16xf32>
      %cst_49 = arith.constant dense<0.000000e+00> : vector<8x8xf32>
      %57 = tpu.matmul %52, %54, %cst_49 {dimension_numbers = #tpu.dot_dimension_numbers<[1], [1], [0], [0], [0, 0, 1, 0], [], []>, precision = #tpu.contract_precision<fp32>} : vector<8x16xf32>, vector<8x16xf32>, vector<8x8xf32> -> vector<8x8xf32>
      %58 = arith.addf %57, %11 : vector<8x8xf32>
      %c1_50 = arith.constant 1 : index
      %c0_51 = arith.constant 0 : index
      %c0_52 = arith.constant 0 : index
      %59 = vector.load %arg10[%c1_50, %c0_51, %c0_52] : memref<2x8x1xf32, #tpu.memory_space<vmem>>, vector<1x8x1xf32>
      %60 = vector.shape_cast %59 : vector<1x8x1xf32> to vector<8x1xf32>
      %cst_53 = arith.constant dense<0xFF800000> : vector<8xf32>
      %61 = vector.multi_reduction <maximumf>, %58, %cst_53 [1] : vector<8x8xf32> to vector<8xf32>
      %62 = vector.shape_cast %61 : vector<8xf32> to vector<8x1xf32>
      %63 = arith.maximumf %60, %62 : vector<8x1xf32>
      %64 = arith.subf %60, %63 : vector<8x1xf32>
      %65 = math.exp %64 : vector<8x1xf32>
      %66 = vector.broadcast %63 : vector<8x1xf32> to vector<8x8xf32>
      %67 = arith.subf %58, %66 : vector<8x8xf32>
      %68 = math.exp %67 : vector<8x8xf32>
      %c1_54 = arith.constant 1 : index
      %c0_55 = arith.constant 0 : index
      %c0_56 = arith.constant 0 : index
      %69 = vector.load %arg11[%c1_54, %c0_55, %c0_56] : memref<2x8x1xf32, #tpu.memory_space<vmem>>, vector<1x8x1xf32>
      %70 = vector.shape_cast %69 : vector<1x8x1xf32> to vector<8x1xf32>
      %71 = arith.mulf %65, %70 : vector<8x1xf32>
      %cst_57 = arith.constant dense<0.000000e+00> : vector<8xf32>
      %72 = vector.multi_reduction <add>, %68, %cst_57 [1] : vector<8x8xf32> to vector<8xf32>
      %73 = vector.shape_cast %72 : vector<8xf32> to vector<8x1xf32>
      %74 = arith.addf %71, %73 : vector<8x1xf32>
      %c1_58 = arith.constant 1 : index
      %c0_59 = arith.constant 0 : index
      %c0_60 = arith.constant 0 : index
      %75 = vector.load %arg11[%c1_58, %c0_59, %c0_60] : memref<2x8x1xf32, #tpu.memory_space<vmem>>, vector<1x8x1xf32>
      %76 = vector.shape_cast %75 : vector<1x8x1xf32> to vector<8x1xf32>
      %77 = vector.shape_cast %74 : vector<8x1xf32> to vector<1x8x1xf32>
      tpu.vector_store %arg11[%c1_58, %c0_59, %c0_60], %77 {strides = array<i32>} : memref<2x8x1xf32, #tpu.memory_space<vmem>>, vector<1x8x1xf32>,
      %c1_61 = arith.constant 1 : index
      %c0_62 = arith.constant 0 : index
      %c0_63 = arith.constant 0 : index
      %78 = vector.load %arg12[%c1_61, %c0_62, %c0_63] : memref<2x8x16xf32, #tpu.memory_space<vmem>>, vector<1x8x16xf32>
      %79 = vector.shape_cast %78 : vector<1x8x16xf32> to vector<8x16xf32>
      %80 = vector.broadcast %65 : vector<8x1xf32> to vector<8x16xf32>
      %81 = arith.mulf %80, %79 : vector<8x16xf32>
      %cst_64 = arith.constant dense<0.000000e+00> : vector<8x16xf32>
      %82 = tpu.matmul %68, %56, %cst_64 {dimension_numbers = #tpu.dot_dimension_numbers<[1], [0], [0], [1], [0, 0, 1, 1], [], []>, precision = #tpu.contract_precision<fp32>} : vector<8x8xf32>, vector<8x16xf32>, vector<8x16xf32> -> vector<8x16xf32>
      %83 = arith.addf %81, %82 : vector<8x16xf32>
      %c1_65 = arith.constant 1 : index
      %c0_66 = arith.constant 0 : index
      %c0_67 = arith.constant 0 : index
      %84 = vector.load %arg12[%c1_65, %c0_66, %c0_67] : memref<2x8x16xf32, #tpu.memory_space<vmem>>, vector<1x8x16xf32>
      %85 = vector.shape_cast %84 : vector<1x8x16xf32> to vector<8x16xf32>
      %86 = vector.shape_cast %83 : vector<8x16xf32> to vector<1x8x16xf32>
      tpu.vector_store %arg12[%c1_65, %c0_66, %c0_67], %86 {strides = array<i32>} : memref<2x8x16xf32, #tpu.memory_space<vmem>>, vector<1x8x16xf32>,
      %c1_68 = arith.constant 1 : index
      %c0_69 = arith.constant 0 : index
      %c0_70 = arith.constant 0 : index
      %87 = vector.load %arg10[%c1_68, %c0_69, %c0_70] : memref<2x8x1xf32, #tpu.memory_space<vmem>>, vector<1x8x1xf32>
      %88 = vector.shape_cast %87 : vector<1x8x1xf32> to vector<8x1xf32>
      %89 = vector.shape_cast %63 : vector<8x1xf32> to vector<1x8x1xf32>
      tpu.vector_store %arg10[%c1_68, %c0_69, %c0_70], %89 {strides = array<i32>} : memref<2x8x1xf32, #tpu.memory_space<vmem>>, vector<1x8x1xf32>,
    } else {
    }
    %c0_i32_2 = arith.constant 0 : i32
    %8 = arith.cmpi eq, %arg2, %c0_i32_2 : i32
    %9 = arith.extui %8 : i1 to i32
    %c0_i32_3 = arith.constant 0 : i32
    %10 = arith.cmpi ne, %9, %c0_i32_3 : i32
    scf.if %10 {
      %c0 = arith.constant 0 : index
      %c0_4 = arith.constant 0 : index
      %c0_5 = arith.constant 0 : index
      %11 = vector.load %arg11[%c0, %c0_4, %c0_5] : memref<2x8x1xf32, #tpu.memory_space<vmem>>, vector<2x8x1xf32>
      %12 = tpu.reciprocal %11 {approx = true} : vector<2x8x1xf32> -> vector<2x8x1xf32>
      %c0_6 = arith.constant 0 : index
      %c0_7 = arith.constant 0 : index
      %c0_8 = arith.constant 0 : index
      %13 = vector.load %arg12[%c0_6, %c0_7, %c0_8] : memref<2x8x16xf32, #tpu.memory_space<vmem>>, vector<2x8x16xf32>
      %14 = vector.broadcast %12 : vector<2x8x1xf32> to vector<2x8x16xf32>
      %15 = arith.mulf %13, %14 : vector<2x8x16xf32>
      %c0_9 = arith.constant 0 : index
      %c0_10 = arith.constant 0 : index
      %c0_11 = arith.constant 0 : index
      %c0_12 = arith.constant 0 : index
      %16 = vector.load %arg9[%c0_9, %c0_10, %c0_11, %c0_12] : memref<1x2x8x16xf32, #tpu.memory_space<vmem>>, vector<1x2x8x16xf32>
      %17 = vector.shape_cast %16 : vector<1x2x8x16xf32> to vector<2x8x16xf32>
      %18 = vector.shape_cast %15 : vector<2x8x16xf32> to vector<1x2x8x16xf32>
      tpu.vector_store %arg9[%c0_9, %c0_10, %c0_11, %c0_12], %18 {strides = array<i32>} : memref<1x2x8x16xf32, #tpu.memory_space<vmem>>, vector<1x2x8x16xf32>,
    } else {
    }
    return
  }
  func.func @transform_0(%arg0: i32, %arg1: i32, %arg2: i32, %arg3: memref<1x1xi32, #tpu.memory_space<smem>>, %arg4: memref<1xi32, #tpu.memory_space<smem>>) -> (i32, i32, i32, i32) {
    %c0_i32 = arith.constant 0 : i32
    %c0_i32_0 = arith.constant 0 : i32
    %c0_i32_1 = arith.constant 0 : i32
    return %arg0, %c0_i32, %arg1, %c0_i32_0 : i32, i32, i32, i32
  }
  func.func @transform_1(%arg0: i32, %arg1: i32, %arg2: i32, %arg3: memref<1x1xi32, #tpu.memory_space<smem>>, %arg4: memref<1xi32, #tpu.memory_space<smem>>) -> (i32, i32, i32, i32) {
    %0 = arith.index_cast %arg1 : i32 to index
    %1 = arith.index_cast %arg2 : i32 to index
    %2 = memref.load %arg3[%0, %1] : memref<1x1xi32, #tpu.memory_space<smem>>
    %c0_i32 = arith.constant 0 : i32
    %c0_i32_0 = arith.constant 0 : i32
    %c0_i32_1 = arith.constant 0 : i32
    return %arg0, %c0_i32, %2, %c0_i32_0 : i32, i32, i32, i32
  }
  func.func @transform_2(%arg0: i32, %arg1: i32, %arg2: i32, %arg3: memref<1x1xi32, #tpu.memory_space<smem>>, %arg4: memref<1xi32, #tpu.memory_space<smem>>) -> (i32, i32, i32, i32) {
    %0 = arith.index_cast %arg1 : i32 to index
    %1 = arith.index_cast %arg2 : i32 to index
    %2 = memref.load %arg3[%0, %1] : memref<1x1xi32, #tpu.memory_space<smem>>
    %c0_i32 = arith.constant 0 : i32
    %c0_i32_0 = arith.constant 0 : i32
    %c0_i32_1 = arith.constant 0 : i32
    return %arg0, %c0_i32, %2, %c0_i32_0 : i32, i32, i32, i32
  }
  func.func @transform_3(%arg0: i32, %arg1: i32, %arg2: i32, %arg3: memref<1x1xi32, #tpu.memory_space<smem>>, %arg4: memref<1xi32, #tpu.memory_space<smem>>) -> (i32, i32) {
    %0 = arith.index_cast %arg1 : i32 to index
    %1 = arith.index_cast %arg2 : i32 to index
    %2 = memref.load %arg3[%0, %1] : memref<1x1xi32, #tpu.memory_space<smem>>
    %c0_i32 = arith.constant 0 : i32
    return %arg1, %2 : i32, i32
  }
  func.func @transform_4(%arg0: i32, %arg1: i32, %arg2: i32, %arg3: memref<1x1xi32, #tpu.memory_space<smem>>, %arg4: memref<1xi32, #tpu.memory_space<smem>>) -> (i32, i32, i32, i32) {
    %c0_i32 = arith.constant 0 : i32
    %c0_i32_0 = arith.constant 0 : i32
    %c0_i32_1 = arith.constant 0 : i32
    return %arg0, %c0_i32, %arg1, %c0_i32_0 : i32, i32, i32, i32
  }
}

</mosaic_0001>

<llo_original>
// kernel: tpu_custom_call.1
$region0: #{tpu_custom_call.1}
  #allocation0 [shape = 'u32[]', space=smem, size = 0x4, offset = 0x4, fixed_abs, tag = 'smem constant byte address 0x4 - core index']
  #allocation1 [shape = 'u32[72,128]{1,0:T(1,128)}', space=vmem, size = 0x9000, scoped, tag = 'internal scratch']
  #allocation2 [shape = 'f32[2,8,1]{2,1,0:T(8,128)}', space=vmem, size = 0x2000, scoped, tag = 'scratch operand']
  #allocation3 [shape = 'f32[2,8,1]{2,1,0:T(8,128)}', space=vmem, size = 0x2000, scoped, tag = 'scratch operand']
  #allocation4 [shape = 'f32[2,8,16]{2,1,0:T(8,128)}', space=vmem, size = 0x2000, scoped, tag = 'scratch operand']
  #allocation5 [shape = 's32[1]{0}', space=sflag, size = 0x4, scoped, tag = 'scoped memory for tpu_custom_call.1']
  #allocation6 [shape = 's32[1,1]{1,0:T(1,128)S(6)}', space=smem, size = 0x200, scoped, tag = 'prefetched SMEM operand 0']
  #allocation7 [shape = 's32[1]{0:T(128)S(6)}', space=smem, size = 0x200, scoped, tag = 'prefetched SMEM operand 1']
  %s0 = inlined_call_operand.<no memory space> [shape: s32[1,1], index: 0, kind: input, shape index: {}]
  %s1 = inlined_call_operand.<no memory space> [shape: s32[1], index: 1, kind: input, shape index: {}]
  %s2 = inlined_call_operand.hbm [shape: f32[2,2,8,16], index: 2, kind: input, shape index: {}]
  %s3 = inlined_call_operand.hbm [shape: f32[2,2,8,16], index: 3, kind: input, shape index: {}]
  %s4 = inlined_call_operand.hbm [shape: f32[2,2,8,16], index: 4, kind: input, shape index: {}]
  %s5 = inlined_call_operand.hbm [shape: f32[8,8], index: 5, kind: input, shape index: {}]
  %s6 = inlined_call_operand.hbm [shape: f32[2,2,8,16], index: 6, kind: output, shape index: {}]
  %s7 = sld [smem:[#allocation0]]
  $region77: #{tpu_custom_call.1} parent=0
    _
  %s9 = ssub.s32 1, %s7
  %s10 = scalar_select 0, %s9, %s7
  %11 = sst [smem:[#allocation6]] %s0
  %12 = sst [smem:[#allocation7]] %s1
  $region1: #{tpu_custom_call.1} parent=0
    #allocation8 [shape = 'u8[16384]{0}', space=vmem, size = 0x4000, scoped, tag = 'input window, operand 2']
    #allocation9 [shape = 's32[2]{0}', space=sflag, size = 0x8, scoped, tag = 'scoped memory for tpu_custom_call.1']
    #allocation10 [shape = 's32[2]{0}', space=sflag, size = 0x8, scoped, tag = 'scoped memory for tpu_custom_call.1']
    #allocation11 [shape = 'u8[16384]{0}', space=vmem, size = 0x4000, scoped, tag = 'input window, operand 3']
    #allocation12 [shape = 's32[2]{0}', space=sflag, size = 0x8, scoped, tag = 'scoped memory for tpu_custom_call.1']
    #allocation13 [shape = 'u8[16384]{0}', space=vmem, size = 0x4000, scoped, tag = 'input window, operand 4']
    #allocation14 [shape = 'u8[4096]{0}', space=vmem, size = 0x1000, scoped, tag = 'input window, operand 5, single buffered']
    #allocation15 [shape = 's32[1]{0}', space=sflag, size = 0x4, scoped, tag = 'scoped memory for tpu_custom_call.1']
    #allocation16 [shape = 'u8[16384]{0}', space=vmem, size = 0x4000, scoped, tag = 'output window, operand 0']
    %13 = vsyncpa [#allocation9], 0
    %s14 = scalar_lea.sflag [#allocation9], 1
    %15 = vsyncpa %s14, 0
    %16 = vsyncpa [#allocation12], 0
    %s17 = scalar_lea.sflag [#allocation12], 1
    %18 = vsyncpa %s17, 0
    %19 = vsyncpa [#allocation15], 0
    %20 = vsyncpa [#allocation10], 0
    %s21 = scalar_lea.sflag [#allocation10], 1
    %22 = vsyncpa %s21, 0
    loop: start=0, step=1, limit=4
    $region2: #{tpu_custom_call.1} parent=1 // loop_pre_header
      _
    $region3: #{tpu_custom_call.1} parent=1 // loop_header
      %s24 = sphi 0, %s28
      %p25 = scmp.ge.s32.totalorder %s24, 4
      %s31 = sphi 0, %s50
      %s32 = sphi 0, %s46
      %s33 = sphi 0, %s42
      %s34 = sphi 0, %s31
      %s35 = sphi 0, %s32
      %s36 = sphi 0, %s33
      %s37 = sphi 0, %s34
      %s38 = sphi 0, %s35
      %s39 = sphi 0, %s36
      %s55 = sphi 0, %s57
      %s58 = sphi 0, %s55
      %s59 = sphi 0, %s58
      %s75 = sphi 0, %s59
      %s99 = sphi 0, %s101
      %s102 = sphi 0, %s99
      %s103 = sphi 0, %s102
      %s119 = sphi 0, %s103
      %s143 = sphi 0, %s145
      %s146 = sphi 0, %s143
      %s147 = sphi 0, %s146
      %s163 = sphi 0, %s147
      %s187 = sphi 0, %s189
      %s190 = sphi 0, %s187
      %s191 = sphi 0, %s190
      %s207 = sphi 0, %s191
      %s215 = sphi 0, %s217
      %s218 = sphi 0, %s215
      %s219 = sphi 0, %s218
      %s235 = sphi 0, %s219
    $region4: #{tpu_custom_call.1} parent=1 // loop_header_branch
      %27 = sbr.rel (%p25) target = $region8
    $region5: #{tpu_custom_call.1} parent=1 // loop_body
      %s29 = ssub.s32 %s24, 1
      %s30 = ssub.s32 %s24, 2
      %s40 = sadd.s32 1, %s33
      %p41 = scmp.ge.s32.totalorder %s40, 1
      %s42 = scalar_select %p41, 0, %s40
      %s43 = sadd.s32 1, %s32
      %s44 = scalar_select %p41, %s43, %s32
      %p45 = scmp.ge.s32.totalorder %s44, 1
      %s46 = scalar_select %p45, 0, %s44
      %s47 = sadd.s32 1, %s31
      %s48 = scalar_select %p45, %s47, %s31
      %p49 = scmp.ge.s32.totalorder %s48, 2
      %s50 = scalar_select %p49, 0, %s48
      %s51 = ssub.s32 %s31, %s50
      %s52 = ssub.s32 %s32, %s46
      %s53 = sor.u32 %s51, %s52
      %p54 = scmp.eq.s32.totalorder %s53, 0
      %s56 = sadd.s32 %s55, 1
      %s57 = scalar_select %p54, %s55, %s56
      %p60 = pneg %p54
      %p61 = scmp.eq.s32.totalorder %s24, 1
      %p62 = por %p60, %p61
      %p63 = scmp.ne.s32.totalorder %s55, %s58
      %p64 = scmp.eq.s32.totalorder %s24, 0
      %p65 = por %p63, %p64
      %p66 = scmp.ne.s32.totalorder %s55, %s58
      %p67 = scmp.eq.s32.totalorder %s29, 1
      %p68 = por %p66, %p67
      %p69 = scmp.ne.s32.totalorder %s58, %s59
      %p70 = scmp.eq.s32.totalorder %s29, 0
      %p71 = por %p69, %p70
      %p72 = scmp.ne.s32.totalorder %s58, %s59
      %p73 = scmp.eq.s32.totalorder %s30, 1
      %p74 = por %p72, %p73
      %p76 = scmp.ne.s32.totalorder %s59, %s75
      %p77 = scmp.eq.s32.totalorder %s30, 0
      %p78 = por %p76, %p77
      %s79 = sshra.s32 %s33, 7
      %s80 = sand.u32 %s33, 127
      %s81 = sadd.s32 %s79, %s32
      %s82 = smul.u32 %s81, 128
      %s83 = sshra.s32 %s33, 7
      %s84 = sand.u32 %s33, 127
      %s85 = sadd.s32 %s82, %s84
      %s86 = sld [smem:[#allocation6 + %s85]]
      %s87 = sshra.s32 %s42, 7
      %s88 = sand.u32 %s42, 127
      %s89 = sadd.s32 %s87, %s46
      %s90 = smul.u32 %s89, 128
      %s91 = sshra.s32 %s42, 7
      %s92 = sand.u32 %s42, 127
      %s93 = sadd.s32 %s90, %s92
      %s94 = sld [smem:[#allocation6 + %s93]]
      %s95 = ssub.s32 %s31, %s50
      %s96 = ssub.s32 %s86, %s94
      %s97 = sor.u32 %s95, %s96
      %p98 = scmp.eq.s32.totalorder %s97, 0
      %s100 = sadd.s32 %s99, 1
      %s101 = scalar_select %p98, %s99, %s100
      %p104 = pneg %p98
      %p105 = scmp.eq.s32.totalorder %s24, 1
      %p106 = por %p104, %p105
      %p107 = scmp.ne.s32.totalorder %s99, %s102
      %p108 = scmp.eq.s32.totalorder %s24, 0
      %p109 = por %p107, %p108
      %p110 = scmp.ne.s32.totalorder %s99, %s102
      %p111 = scmp.eq.s32.totalorder %s29, 1
      %p112 = por %p110, %p111
      %p113 = scmp.ne.s32.totalorder %s102, %s103
      %p114 = scmp.eq.s32.totalorder %s29, 0
      %p115 = por %p113, %p114
      %p116 = scmp.ne.s32.totalorder %s102, %s103
      %p117 = scmp.eq.s32.totalorder %s30, 1
      %p118 = por %p116, %p117
      %p120 = scmp.ne.s32.totalorder %s103, %s119
      %p121 = scmp.eq.s32.totalorder %s30, 0
      %p122 = por %p120, %p121
      %s123 = sshra.s32 %s33, 7
      %s124 = sand.u32 %s33, 127
      %s125 = sadd.s32 %s123, %s32
      %s126 = smul.u32 %s125, 128
      %s127 = sshra.s32 %s33, 7
      %s128 = sand.u32 %s33, 127
      %s129 = sadd.s32 %s126, %s128
      %s130 = sld [smem:[#allocation6 + %s129]]
      %s131 = sshra.s32 %s42, 7
      %s132 = sand.u32 %s42, 127
      %s133 = sadd.s32 %s131, %s46
      %s134 = smul.u32 %s133, 128
      %s135 = sshra.s32 %s42, 7
      %s136 = sand.u32 %s42, 127
      %s137 = sadd.s32 %s134, %s136
      %s138 = sld [smem:[#allocation6 + %s137]]
      %s139 = ssub.s32 %s31, %s50
      %s140 = ssub.s32 %s130, %s138
      %s141 = sor.u32 %s139, %s140
      %p142 = scmp.eq.s32.totalorder %s141, 0
      %s144 = sadd.s32 %s143, 1
      %s145 = scalar_select %p142, %s143, %s144
      %p148 = pneg %p142
      %p149 = scmp.eq.s32.totalorder %s24, 1
      %p150 = por %p148, %p149
      %p151 = scmp.ne.s32.totalorder %s143, %s146
      %p152 = scmp.eq.s32.totalorder %s24, 0
      %p153 = por %p151, %p152
      %p154 = scmp.ne.s32.totalorder %s143, %s146
      %p155 = scmp.eq.s32.totalorder %s29, 1
      %p156 = por %p154, %p155
      %p157 = scmp.ne.s32.totalorder %s146, %s147
      %p158 = scmp.eq.s32.totalorder %s29, 0
      %p159 = por %p157, %p158
      %p160 = scmp.ne.s32.totalorder %s146, %s147
      %p161 = scmp.eq.s32.totalorder %s30, 1
      %p162 = por %p160, %p161
      %p164 = scmp.ne.s32.totalorder %s147, %s163
      %p165 = scmp.eq.s32.totalorder %s30, 0
      %p166 = por %p164, %p165
      %s167 = sshra.s32 %s33, 7
      %s168 = sand.u32 %s33, 127
      %s169 = sadd.s32 %s167, %s32
      %s170 = smul.u32 %s169, 128
      %s171 = sshra.s32 %s33, 7
      %s172 = sand.u32 %s33, 127
      %s173 = sadd.s32 %s170, %s172
      %s174 = sld [smem:[#allocation6 + %s173]]
      %s175 = sshra.s32 %s42, 7
      %s176 = sand.u32 %s42, 127
      %s177 = sadd.s32 %s175, %s46
      %s178 = smul.u32 %s177, 128
      %s179 = sshra.s32 %s42, 7
      %s180 = sand.u32 %s42, 127
      %s181 = sadd.s32 %s178, %s180
      %s182 = sld [smem:[#allocation6 + %s181]]
      %s183 = ssub.s32 %s32, %s46
      %s184 = ssub.s32 %s174, %s182
      %s185 = sor.u32 %s183, %s184
      %p186 = scmp.eq.s32.totalorder %s185, 0
      %s188 = sadd.s32 %s187, 1
      %s189 = scalar_select %p186, %s187, %s188
      %p192 = pneg %p186
      %p193 = scmp.eq.s32.totalorder %s24, 1
      %p194 = por %p192, %p193
      %p195 = scmp.ne.s32.totalorder %s187, %s190
      %p196 = scmp.eq.s32.totalorder %s24, 0
      %p197 = por %p195, %p196
      %p198 = scmp.ne.s32.totalorder %s187, %s190
      %p199 = scmp.eq.s32.totalorder %s29, 1
      %p200 = por %p198, %p199
      %p201 = scmp.ne.s32.totalorder %s190, %s191
      %p202 = scmp.eq.s32.totalorder %s29, 0
      %p203 = por %p201, %p202
      %p204 = scmp.ne.s32.totalorder %s190, %s191
      %p205 = scmp.eq.s32.totalorder %s30, 1
      %p206 = por %p204, %p205
      %p208 = scmp.ne.s32.totalorder %s191, %s207
      %p209 = scmp.eq.s32.totalorder %s30, 0
      %p210 = por %p208, %p209
      %s211 = ssub.s32 %s31, %s50
      %s212 = ssub.s32 %s32, %s46
      %s213 = sor.u32 %s211, %s212
      %p214 = scmp.eq.s32.totalorder %s213, 0
      %s216 = sadd.s32 %s215, 1
      %s217 = scalar_select %p214, %s215, %s216
      %p220 = pneg %p214
      %p221 = scmp.eq.s32.totalorder %s24, 1
      %p222 = por %p220, %p221
      %p223 = scmp.ne.s32.totalorder %s215, %s218
      %p224 = scmp.eq.s32.totalorder %s24, 0
      %p225 = por %p223, %p224
      %p226 = scmp.ne.s32.totalorder %s215, %s218
      %p227 = scmp.eq.s32.totalorder %s29, 1
      %p228 = por %p226, %p227
      %p229 = scmp.ne.s32.totalorder %s218, %s219
      %p230 = scmp.eq.s32.totalorder %s29, 0
      %p231 = por %p229, %p230
      %p232 = scmp.ne.s32.totalorder %s218, %s219
      %p233 = scmp.eq.s32.totalorder %s30, 1
      %p234 = por %p232, %p233
      %p236 = scmp.ne.s32.totalorder %s219, %s235
      %p237 = scmp.eq.s32.totalorder %s30, 0
      %p238 = por %p236, %p237
      %p239 = scmp.le.s32.totalorder 1, %s24
      %p240 = scmp.lt.s32.totalorder %s24, 3
      %p241 = pnand %p239, %p240
      %p242 = pneg %p241
      // Predicated region
      $region9: #{tpu_custom_call.1} parent=5 // pred_check
        _
      $region10: #{tpu_custom_call.1} parent=5 // pred_check_branch
        %244 = sbr.rel (%p241) target = $region12
      $region11: #{tpu_custom_call.1} parent=5 // pred_region
        %s245 = ssub.s32 %s24, 1
        // Predicated region
        $region13: #{tpu_custom_call.1} parent=11 // pred_check
          %p246 = pneg %p203
        $region14: #{tpu_custom_call.1} parent=11 // pred_check_branch
          %248 = sbr.rel (%p246) target = $region16
        $region15: #{tpu_custom_call.1} parent=11 // pred_region
          %s249 = sshra.s32 %s36, 7
          %s250 = sand.u32 %s36, 127
          %s251 = sadd.s32 %s249, %s35
          %s252 = smul.u32 %s251, 128
          %s253 = sshra.s32 %s36, 7
          %s254 = sand.u32 %s36, 127
          %s255 = sadd.s32 %s252, %s254
          %s256 = sld [smem:[#allocation6 + %s255]]
          %258 = vsyncadd [#allocation15], 0
          %s259 = sadd.s32 %s256, %s35
          %s260 = smul.addr %s259, 8
          %s261 = scalar_lea.hbm %s5, %s260
          %s263 = sshll.u32 %s261, 4
          %s264 = int_to_ptr.hbm [resolvable:$true] %s263
          %s265 = sshll.u32 [#allocation14], 4
          %s266 = int_to_ptr.vmem [resolvable:$true] %s265
          %268 = dma.hbm_to_vmem [thread:$0]  %s264, 128, %s266, [#allocation15]
        $region16: #{tpu_custom_call.1} parent=11 // pred_fallthru
          _
      $region12: #{tpu_custom_call.1} parent=5 // pred_fallthru
        _
      %p269 = scmp.lt.s32.totalorder %s24, 2
      // Predicated region
      $region17: #{tpu_custom_call.1} parent=5 // pred_check
        %p270 = pneg %p269
      $region18: #{tpu_custom_call.1} parent=5 // pred_check_branch
        %272 = sbr.rel (%p270) target = $region20
      $region19: #{tpu_custom_call.1} parent=5 // pred_region
        // Predicated region
        $region21: #{tpu_custom_call.1} parent=19 // pred_check
          %p273 = pneg %p65
        $region22: #{tpu_custom_call.1} parent=19 // pred_check_branch
          %275 = sbr.rel (%p273) target = $region24
        $region23: #{tpu_custom_call.1} parent=19 // pred_region
          %s276 = sand.u32 %s55, 1
          %s277 = scalar_lea.sflag [#allocation9], %s276
          %s278 = sand.u32 %s55, 1
          %s279 = smul.addr %s278, 16
          %s280 = scalar_lea.vmem [#allocation8], %s279
          %282 = vsyncadd %s277, 0
          %s283 = smul.addr %s31, 2
          %s284 = sadd.s32 %s32, %s283
          %s285 = smul.addr %s284, 8
          %s286 = scalar_lea.hbm %s2, %s285
          %s287 = sshll.u32 %s286, 4
          %s288 = int_to_ptr.hbm [resolvable:$true] %s287
          %s289 = sshll.u32 %s280, 4
          %s290 = int_to_ptr.vmem [resolvable:$true] %s289
          %295 = dma.hbm_to_vmem [thread:$0]  %s288, 256, %s290, %s277, 128, 128, 8
        $region24: #{tpu_custom_call.1} parent=19 // pred_fallthru
          _
        // Predicated region
        $region25: #{tpu_custom_call.1} parent=19 // pred_check
          %p296 = pneg %p109
        $region26: #{tpu_custom_call.1} parent=19 // pred_check_branch
          %298 = sbr.rel (%p296) target = $region28
        $region27: #{tpu_custom_call.1} parent=19 // pred_region
          %s299 = sand.u32 %s24, 1
          %s300 = scalar_lea.sflag [#allocation12], %s299
          %s301 = sand.u32 %s99, 1
          %s302 = smul.addr %s301, 16
          %s303 = scalar_lea.vmem [#allocation11], %s302
          %s304 = sshra.s32 %s33, 7
          %s305 = sand.u32 %s33, 127
          %s306 = sadd.s32 %s304, %s32
          %s307 = smul.u32 %s306, 128
          %s308 = sshra.s32 %s33, 7
          %s309 = sand.u32 %s33, 127
          %s310 = sadd.s32 %s307, %s309
          %s311 = sld [smem:[#allocation6 + %s310]]
          %313 = vsyncadd %s300, 0
          %s314 = smul.addr %s31, 2
          %s315 = sadd.s32 %s311, %s314
          %s316 = smul.addr %s315, 8
          %s317 = scalar_lea.hbm %s3, %s316
          %s318 = sshll.u32 %s317, 4
          %s319 = int_to_ptr.hbm [resolvable:$true] %s318
          %s320 = sshll.u32 %s303, 4
          %s321 = int_to_ptr.vmem [resolvable:$true] %s320
          %326 = dma.hbm_to_vmem [thread:$0]  %s319, 256, %s321, %s300, 128, 128, 8
        $region28: #{tpu_custom_call.1} parent=19 // pred_fallthru
          _
        // Predicated region
        $region29: #{tpu_custom_call.1} parent=19 // pred_check
          %p327 = pneg %p153
        $region30: #{tpu_custom_call.1} parent=19 // pred_check_branch
          %329 = sbr.rel (%p327) target = $region32
        $region31: #{tpu_custom_call.1} parent=19 // pred_region
          %s330 = sand.u32 %s24, 1
          %s331 = scalar_lea.sflag [#allocation12], %s330
          %s332 = sand.u32 %s143, 1
          %s333 = smul.addr %s332, 16
          %s334 = scalar_lea.vmem [#allocation13], %s333
          %s335 = sshra.s32 %s33, 7
          %s336 = sand.u32 %s33, 127
          %s337 = sadd.s32 %s335, %s32
          %s338 = smul.u32 %s337, 128
          %s339 = sshra.s32 %s33, 7
          %s340 = sand.u32 %s33, 127
          %s341 = sadd.s32 %s338, %s340
          %s342 = sld [smem:[#allocation6 + %s341]]
          %344 = vsyncadd %s331, 0
          %s345 = smul.addr %s31, 2
          %s346 = sadd.s32 %s342, %s345
          %s347 = smul.addr %s346, 8
          %s348 = scalar_lea.hbm %s4, %s347
          %s349 = sshll.u32 %s348, 4
          %s350 = int_to_ptr.hbm [resolvable:$true] %s349
          %s351 = sshll.u32 %s334, 4
          %s352 = int_to_ptr.vmem [resolvable:$true] %s351
          %357 = dma.hbm_to_vmem [thread:$0]  %s350, 256, %s352, %s331, 128, 128, 8
        $region32: #{tpu_custom_call.1} parent=19 // pred_fallthru
          _
      $region20: #{tpu_custom_call.1} parent=5 // pred_fallthru
        _
      %p358 = scmp.le.s32.totalorder 1, %s24
      %p359 = scmp.lt.s32.totalorder %s24, 3
      %p360 = pnand %p358, %p359
      %p361 = pneg %p360
      // Predicated region
      $region33: #{tpu_custom_call.1} parent=5 // pred_check
        _
      $region34: #{tpu_custom_call.1} parent=5 // pred_check_branch
        %363 = sbr.rel (%p360) target = $region36
      $region35: #{tpu_custom_call.1} parent=5 // pred_region
        %s364 = ssub.s32 %s24, 1
        %s365 = sand.u32 %s58, 1
        %s366 = scalar_lea.sflag [#allocation9], %s365
        %s367 = sand.u32 %s58, 1
        %s368 = smul.addr %s367, 16
        %s369 = scalar_lea.vmem [#allocation8], %s368
        // Predicated region
        $region37: #{tpu_custom_call.1} parent=35 // pred_check
          %p370 = pneg %p71
        $region38: #{tpu_custom_call.1} parent=35 // pred_check_branch
          %372 = sbr.rel (%p370) target = $region40
        $region39: #{tpu_custom_call.1} parent=35 // pred_region
          %374 = dma.done %s366, 256
        $region40: #{tpu_custom_call.1} parent=35 // pred_fallthru
          _
        %s375 = sand.u32 %s29, 1
        %s376 = scalar_lea.sflag [#allocation12], %s375
        %s377 = sand.u32 %s102, 1
        %s378 = smul.addr %s377, 16
        %s379 = scalar_lea.vmem [#allocation11], %s378
        // Predicated region
        $region41: #{tpu_custom_call.1} parent=35 // pred_check
          %p380 = pneg %p115
        $region42: #{tpu_custom_call.1} parent=35 // pred_check_branch
          %382 = sbr.rel (%p380) target = $region44
        $region43: #{tpu_custom_call.1} parent=35 // pred_region
          %384 = dma.done %s376, 256
        $region44: #{tpu_custom_call.1} parent=35 // pred_fallthru
          _
        %s385 = sand.u32 %s29, 1
        %s386 = scalar_lea.sflag [#allocation12], %s385
        %s387 = sand.u32 %s146, 1
        %s388 = smul.addr %s387, 16
        %s389 = scalar_lea.vmem [#allocation13], %s388
        // Predicated region
        $region45: #{tpu_custom_call.1} parent=35 // pred_check
          %p390 = pneg %p159
        $region46: #{tpu_custom_call.1} parent=35 // pred_check_branch
          %392 = sbr.rel (%p390) target = $region48
        $region47: #{tpu_custom_call.1} parent=35 // pred_region
          %394 = dma.done %s386, 256
        $region48: #{tpu_custom_call.1} parent=35 // pred_fallthru
          _
        // Predicated region
        $region49: #{tpu_custom_call.1} parent=35 // pred_check
          %p395 = pneg %p203
        $region50: #{tpu_custom_call.1} parent=35 // pred_check_branch
          %397 = sbr.rel (%p395) target = $region52
        $region51: #{tpu_custom_call.1} parent=35 // pred_region
          %399 = dma.done [#allocation15], 128
        $region52: #{tpu_custom_call.1} parent=35 // pred_fallthru
          _
        %s400 = sand.u32 %s58, 1
        %s401 = scalar_lea.sflag [#allocation9], %s400
        %s402 = sand.u32 %s58, 1
        %s403 = smul.addr %s402, 16
        %s404 = scalar_lea.vmem [#allocation8], %s403
        %p405 = pneg %p71
        %p406 = pneg %p68
        %s407 = sand.u32 %s29, 1
        %s408 = scalar_lea.sflag [#allocation12], %s407
        %s409 = sand.u32 %s102, 1
        %s410 = smul.addr %s409, 16
        %s411 = scalar_lea.vmem [#allocation11], %s410
        %p412 = pneg %p115
        %p413 = pneg %p112
        %s414 = sand.u32 %s29, 1
        %s415 = scalar_lea.sflag [#allocation12], %s414
        %s416 = sand.u32 %s146, 1
        %s417 = smul.addr %s416, 16
        %s418 = scalar_lea.vmem [#allocation13], %s417
        %p419 = pneg %p159
        %p420 = pneg %p156
        %p421 = pneg %p203
        %p422 = pneg %p200
        %p423 = pneg %p231
        %p424 = pneg %p228
        %s425 = sand.u32 %s218, 1
        %s426 = scalar_lea.sflag [#allocation10], %s425
        %s427 = sand.u32 %s218, 1
        %s428 = smul.addr %s427, 16
        %s429 = scalar_lea.vmem [#allocation16], %s428
        %s430 = sshra.s32 %s36, 7
        %s431 = sand.u32 %s36, 127
        %s432 = sadd.s32 %s430, %s35
        %s433 = smul.u32 %s432, 128
        %s434 = sshra.s32 %s36, 7
        %s435 = sand.u32 %s36, 127
        %s436 = sadd.s32 %s433, %s435
        %s437 = sld [smem:[#allocation6 + %s436]]
        %s438 = sshra.s32 %s36, 7
        %s439 = sand.u32 %s36, 127
        %s440 = sadd.s32 %s438, %s35
        %s441 = smul.u32 %s440, 128
        %s442 = sshra.s32 %s36, 7
        %s443 = sand.u32 %s36, 127
        %s444 = sadd.s32 %s441, %s443
        %s445 = sld [smem:[#allocation6 + %s444]]
        %s446 = sshra.s32 %s36, 7
        %s447 = sand.u32 %s36, 127
        %s448 = sadd.s32 %s446, %s35
        %s449 = smul.u32 %s448, 128
        %s450 = sshra.s32 %s36, 7
        %s451 = sand.u32 %s36, 127
        %s452 = sadd.s32 %s449, %s451
        %s453 = sld [smem:[#allocation6 + %s452]]
        %p454 = scmp.eq.s32.totalorder %s36, 0
        // Predicated region
        $region53: #{tpu_custom_call.1} parent=35 // pred_check
          %p455 = pneg %p454
        $region54: #{tpu_custom_call.1} parent=35 // pred_check_branch
          %457 = sbr.rel (%p455) target = $region56
        $region55: #{tpu_custom_call.1} parent=35 // pred_region
          %vm458 = vcmask 7168
          %459 = vst.msk [vmem:[#allocation2] sm:$0xff] %vm458, -inf
          %460 = vst.msk [vmem:[#allocation2 + $0x8] sm:$0xff] %vm458, -inf
          %461 = vst.msk [vmem:[#allocation3] sm:$0xff] %vm458, 0.0
          %462 = vst.msk [vmem:[#allocation3 + $0x8] sm:$0xff] %vm458, 0.0
          %vm463 = vcmask 130048
          %464 = vst.msk [vmem:[#allocation4] sm:$0xff] %vm463, 0.0
          %465 = vst.msk [vmem:[#allocation4 + $0x8] sm:$0xff] %vm463, 0.0
        $region56: #{tpu_custom_call.1} parent=35 // pred_fallthru
          _
        %s466 = sld [smem:[#allocation7 + %s35]]
        %p467 = scmp.lt.s32.totalorder %s36, %s466
        // Predicated region
        $region57: #{tpu_custom_call.1} parent=35 // pred_check
          %p468 = pneg %p467
        $region58: #{tpu_custom_call.1} parent=35 // pred_check_branch
          %470 = sbr.rel (%p468) target = $region60
        $region59: #{tpu_custom_call.1} parent=35 // pred_region
          %v471 = vld [vmem:[#allocation14] sm:$0xff]
          %v472 = vld [vmem:[%s369] sm:$0xff]
          %v473 = vld [vmem:[%s379] sm:$0xff]
          %v474 = vld [vmem:[%s389] sm:$0xff]
          %vm475 = vcmask 130048
          %v477 = vsel %vm475, %v472, 0
          %v480 = vsel %vm475, %v473, 0
          %482 = vmatpush.xpose.msra.mxu0 0.0
          %483 = vmatpush.xpose.msra.mxu0 0.0
          %484 = vmatpush.xpose.msra.mxu0 0.0
          %485 = vmatpush.xpose.msra.mxu0 0.0
          %486 = vmatpush.xpose.msra.mxu0 0.0
          %487 = vmatpush.xpose.msra.mxu0 0.0
          %488 = vmatpush.xpose.msra.mxu0 0.0
          %489 = vmatpush.xpose.msra.mxu0 0.0
          %490 = vmatpush.xpose.msra.mxu0 0.0
          %491 = vmatpush.xpose.msra.mxu0 0.0
          %492 = vmatpush.xpose.msra.mxu0 0.0
          %493 = vmatpush.xpose.msra.mxu0 0.0
          %494 = vmatpush.xpose.msra.mxu0 0.0
          %495 = vmatpush.xpose.msra.mxu0 0.0
          %496 = vmatpush.xpose.msra.mxu0 0.0
          %v497 = vand.u32 %v480, 4294901760
          %498 = vmatpush.xpose.msra.mxu0 %v497
          %v499 = vand.u32 %v477, 4294901760
          %v500 = vsub.f32 %v477, %v499
          %v501 = vand.u32 %v500, 4294901760
          %v502 = vsub.f32 %v500, %v501
          %v503 = vand.u32 %v502, 4294901760
          %504 = vmatmul.f32.gmra.mxu0 %v503
          %v505 = vpop.f32.mrf.mxu0
          %v506 = vadd.f32 %v471, %v505
          %507 = vdwg.mxu0
          %508 = vmatpush.xpose.msra.mxu0 0.0
          %509 = vmatpush.xpose.msra.mxu0 0.0
          %510 = vmatpush.xpose.msra.mxu0 0.0
          %511 = vmatpush.xpose.msra.mxu0 0.0
          %512 = vmatpush.xpose.msra.mxu0 0.0
          %513 = vmatpush.xpose.msra.mxu0 0.0
          %514 = vmatpush.xpose.msra.mxu0 0.0
          %515 = vmatpush.xpose.msra.mxu0 0.0
          %516 = vmatpush.xpose.msra.mxu0 0.0
          %517 = vmatpush.xpose.msra.mxu0 0.0
          %518 = vmatpush.xpose.msra.mxu0 0.0
          %519 = vmatpush.xpose.msra.mxu0 0.0
          %520 = vmatpush.xpose.msra.mxu0 0.0
          %521 = vmatpush.xpose.msra.mxu0 0.0
          %522 = vmatpush.xpose.msra.mxu0 0.0
          %v523 = vand.u32 %v480, 4294901760
          %v524 = vsub.f32 %v480, %v523
          %v525 = vand.u32 %v524, 4294901760
          %v526 = vsub.f32 %v524, %v525
          %v527 = vand.u32 %v526, 4294901760
          %528 = vmatpush.xpose.msra.mxu0 %v527
          %v529 = vand.u32 %v477, 4294901760
          %530 = vmatmul.f32.gmra.mxu0 %v529
          %v531 = vpop.f32.mrf.mxu0
          %v532 = vadd.f32 %v506, %v531
          %533 = vdwg.mxu0
          %534 = vmatpush.xpose.msra.mxu0 0.0
          %535 = vmatpush.xpose.msra.mxu0 0.0
          %536 = vmatpush.xpose.msra.mxu0 0.0
          %537 = vmatpush.xpose.msra.mxu0 0.0
          %538 = vmatpush.xpose.msra.mxu0 0.0
          %539 = vmatpush.xpose.msra.mxu0 0.0
          %540 = vmatpush.xpose.msra.mxu0 0.0
          %541 = vmatpush.xpose.msra.mxu0 0.0
          %542 = vmatpush.xpose.msra.mxu0 0.0
          %543 = vmatpush.xpose.msra.mxu0 0.0
          %544 = vmatpush.xpose.msra.mxu0 0.0
          %545 = vmatpush.xpose.msra.mxu0 0.0
          %546 = vmatpush.xpose.msra.mxu0 0.0
          %547 = vmatpush.xpose.msra.mxu0 0.0
          %548 = vmatpush.xpose.msra.mxu0 0.0
          %v549 = vand.u32 %v480, 4294901760
          %v550 = vsub.f32 %v480, %v549
          %551 = vmatpush.xpose.msra.mxu0 %v550
          %v552 = vand.u32 %v477, 4294901760
          %v553 = vsub.f32 %v477, %v552
          %554 = vmatmul.f32.gmra.mxu0 %v553
          %v555 = vpop.f32.mrf.mxu0
          %v556 = vadd.f32 %v532, %v555
          %557 = vdwg.mxu0
          %558 = vmatpush.xpose.msra.mxu0 0.0
          %559 = vmatpush.xpose.msra.mxu0 0.0
          %560 = vmatpush.xpose.msra.mxu0 0.0
          %561 = vmatpush.xpose.msra.mxu0 0.0
          %562 = vmatpush.xpose.msra.mxu0 0.0
          %563 = vmatpush.xpose.msra.mxu0 0.0
          %564 = vmatpush.xpose.msra.mxu0 0.0
          %565 = vmatpush.xpose.msra.mxu0 0.0
          %566 = vmatpush.xpose.msra.mxu0 0.0
          %567 = vmatpush.xpose.msra.mxu0 0.0
          %568 = vmatpush.xpose.msra.mxu0 0.0
          %569 = vmatpush.xpose.msra.mxu0 0.0
          %570 = vmatpush.xpose.msra.mxu0 0.0
          %571 = vmatpush.xpose.msra.mxu0 0.0
          %572 = vmatpush.xpose.msra.mxu0 0.0
          %v573 = vand.u32 %v480, 4294901760
          %574 = vmatpush.xpose.msra.mxu0 %v573
          %v575 = vand.u32 %v477, 4294901760
          %v576 = vsub.f32 %v477, %v575
          %v577 = vand.u32 %v576, 4294901760
          %578 = vmatmul.f32.gmra.mxu0 %v577
          %v579 = vpop.f32.mrf.mxu0
          %v580 = vadd.f32 %v556, %v579
          %581 = vdwg.mxu0
          %582 = vmatpush.xpose.msra.mxu0 0.0
          %583 = vmatpush.xpose.msra.mxu0 0.0
          %584 = vmatpush.xpose.msra.mxu0 0.0
          %585 = vmatpush.xpose.msra.mxu0 0.0
          %586 = vmatpush.xpose.msra.mxu0 0.0
          %587 = vmatpush.xpose.msra.mxu0 0.0
          %588 = vmatpush.xpose.msra.mxu0 0.0
          %589 = vmatpush.xpose.msra.mxu0 0.0
          %590 = vmatpush.xpose.msra.mxu0 0.0
          %591 = vmatpush.xpose.msra.mxu0 0.0
          %592 = vmatpush.xpose.msra.mxu0 0.0
          %593 = vmatpush.xpose.msra.mxu0 0.0
          %594 = vmatpush.xpose.msra.mxu0 0.0
          %595 = vmatpush.xpose.msra.mxu0 0.0
          %596 = vmatpush.xpose.msra.mxu0 0.0
          %v597 = vand.u32 %v480, 4294901760
          %v598 = vsub.f32 %v480, %v597
          %v599 = vand.u32 %v598, 4294901760
          %600 = vmatpush.xpose.msra.mxu0 %v599
          %v601 = vand.u32 %v477, 4294901760
          %602 = vmatmul.f32.gmra.mxu0 %v601
          %v603 = vpop.f32.mrf.mxu0
          %v604 = vadd.f32 %v580, %v603
          %605 = vdwg.mxu0
          %606 = vmatpush.xpose.msra.mxu0 0.0
          %607 = vmatpush.xpose.msra.mxu0 0.0
          %608 = vmatpush.xpose.msra.mxu0 0.0
          %609 = vmatpush.xpose.msra.mxu0 0.0
          %610 = vmatpush.xpose.msra.mxu0 0.0
          %611 = vmatpush.xpose.msra.mxu0 0.0
          %612 = vmatpush.xpose.msra.mxu0 0.0
          %613 = vmatpush.xpose.msra.mxu0 0.0
          %614 = vmatpush.xpose.msra.mxu0 0.0
          %615 = vmatpush.xpose.msra.mxu0 0.0
          %616 = vmatpush.xpose.msra.mxu0 0.0
          %617 = vmatpush.xpose.msra.mxu0 0.0
          %618 = vmatpush.xpose.msra.mxu0 0.0
          %619 = vmatpush.xpose.msra.mxu0 0.0
          %620 = vmatpush.xpose.msra.mxu0 0.0
          %v621 = vand.u32 %v480, 4294901760
          %622 = vmatpush.xpose.msra.mxu0 %v621
          %v623 = vand.u32 %v477, 4294901760
          %624 = vmatmul.f32.gmra.mxu0 %v623
          %v625 = vpop.f32.mrf.mxu0
          %v626 = vadd.f32 %v604, %v625
          %627 = vdwg.mxu0
          %v628 = vld [vmem:[#allocation2] sm:$0xff]
          %vm629 = vcmask 64512
          %v630 = vsel %vm629, %v626, -inf
          %631 = vmax.xlane.f32.xlu0 %v630
          %v632 = vpop.xlane.xlu0 %631
          %v633 = vmax.f32 %v628, %v632
          %v634 = vsub.f32 %v628, %v633
          %v635 = vmul.f32 %v634, 1.442695
          %v636 = vpow.pop %v635
          %638 = vset.pattern.permute.xlu0 0
          %639 = vperm.xlu0 %638, %v633
          %v640 = vpop.permute.xlu0 %639
          %v642 = vsub.f32 %v626, %v640
          %v643 = vmul.f32 %v642, 1.442695
          %v644 = vpow.pop %v643
          %v645 = vld [vmem:[#allocation3] sm:$0xff]
          %v646 = vmul.f32 %v636, %v645
          %v647 = vsel %vm629, %v644, 0.0
          %648 = vadd.xlane.f32.xlu0 %v647
          %v649 = vpop.xlane.xlu0 %648
          %v650 = vadd.f32 %v646, %v649
          %vm651 = vcmask 7168
          %652 = vst.msk [vmem:[#allocation3] sm:$0xff] %vm651, %v650
          %v653 = vld [vmem:[#allocation4] sm:$0xff]
          %655 = vset.pattern.permute.xlu0 0
          %656 = vperm.xlu0 %655, %v636
          %v657 = vpop.permute.xlu0 %656
          %v659 = vmul.f32 %v657, %v653
          %v661 = vsel %vm629, %v644, 0
          %663 = vmatpush.msra.mxu0 0.0
          %664 = vmatpush.msra.mxu0 0.0
          %665 = vmatpush.msra.mxu0 0.0
          %666 = vmatpush.msra.mxu0 0.0
          %667 = vmatpush.msra.mxu0 0.0
          %668 = vmatpush.msra.mxu0 0.0
          %669 = vmatpush.msra.mxu0 0.0
          %670 = vmatpush.msra.mxu0 0.0
          %671 = vmatpush.msra.mxu0 0.0
          %672 = vmatpush.msra.mxu0 0.0
          %673 = vmatpush.msra.mxu0 0.0
          %674 = vmatpush.msra.mxu0 0.0
          %675 = vmatpush.msra.mxu0 0.0
          %676 = vmatpush.msra.mxu0 0.0
          %677 = vmatpush.msra.mxu0 0.0
          %v678 = vand.u32 %v474, 4294901760
          %679 = vmatpush.msra.mxu0 %v678
          %v680 = vand.u32 %v661, 4294901760
          %v681 = vsub.f32 %v661, %v680
          %v682 = vand.u32 %v681, 4294901760
          %v683 = vsub.f32 %v681, %v682
          %v684 = vand.u32 %v683, 4294901760
          %685 = vmatmul.f32.gmra.mxu0 %v684
          %v686 = vpop.f32.mrf.mxu0
          %v687 = vadd.f32 0.0, %v686
          %688 = vdwg.mxu0
          %689 = vmatpush.msra.mxu0 0.0
          %690 = vmatpush.msra.mxu0 0.0
          %691 = vmatpush.msra.mxu0 0.0
          %692 = vmatpush.msra.mxu0 0.0
          %693 = vmatpush.msra.mxu0 0.0
          %694 = vmatpush.msra.mxu0 0.0
          %695 = vmatpush.msra.mxu0 0.0
          %696 = vmatpush.msra.mxu0 0.0
          %697 = vmatpush.msra.mxu0 0.0
          %698 = vmatpush.msra.mxu0 0.0
          %699 = vmatpush.msra.mxu0 0.0
          %700 = vmatpush.msra.mxu0 0.0
          %701 = vmatpush.msra.mxu0 0.0
          %702 = vmatpush.msra.mxu0 0.0
          %703 = vmatpush.msra.mxu0 0.0
          %v704 = vand.u32 %v474, 4294901760
          %v705 = vsub.f32 %v474, %v704
          %v706 = vand.u32 %v705, 4294901760
          %v707 = vsub.f32 %v705, %v706
          %v708 = vand.u32 %v707, 4294901760
          %709 = vmatpush.msra.mxu0 %v708
          %v710 = vand.u32 %v661, 4294901760
          %711 = vmatmul.f32.gmra.mxu0 %v710
          %v712 = vpop.f32.mrf.mxu0
          %v713 = vadd.f32 %v687, %v712
          %714 = vdwg.mxu0
          %715 = vmatpush.msra.mxu0 0.0
          %716 = vmatpush.msra.mxu0 0.0
          %717 = vmatpush.msra.mxu0 0.0
          %718 = vmatpush.msra.mxu0 0.0
          %719 = vmatpush.msra.mxu0 0.0
          %720 = vmatpush.msra.mxu0 0.0
          %721 = vmatpush.msra.mxu0 0.0
          %722 = vmatpush.msra.mxu0 0.0
          %723 = vmatpush.msra.mxu0 0.0
          %724 = vmatpush.msra.mxu0 0.0
          %725 = vmatpush.msra.mxu0 0.0
          %726 = vmatpush.msra.mxu0 0.0
          %727 = vmatpush.msra.mxu0 0.0
          %728 = vmatpush.msra.mxu0 0.0
          %729 = vmatpush.msra.mxu0 0.0
          %v730 = vand.u32 %v474, 4294901760
          %v731 = vsub.f32 %v474, %v730
          %732 = vmatpush.msra.mxu0 %v731
          %v733 = vand.u32 %v661, 4294901760
          %v734 = vsub.f32 %v661, %v733
          %735 = vmatmul.f32.gmra.mxu0 %v734
          %v736 = vpop.f32.mrf.mxu0
          %v737 = vadd.f32 %v713, %v736
          %738 = vdwg.mxu0
          %739 = vmatpush.msra.mxu0 0.0
          %740 = vmatpush.msra.mxu0 0.0
          %741 = vmatpush.msra.mxu0 0.0
          %742 = vmatpush.msra.mxu0 0.0
          %743 = vmatpush.msra.mxu0 0.0
          %744 = vmatpush.msra.mxu0 0.0
          %745 = vmatpush.msra.mxu0 0.0
          %746 = vmatpush.msra.mxu0 0.0
          %747 = vmatpush.msra.mxu0 0.0
          %748 = vmatpush.msra.mxu0 0.0
          %749 = vmatpush.msra.mxu0 0.0
          %750 = vmatpush.msra.mxu0 0.0
          %751 = vmatpush.msra.mxu0 0.0
          %752 = vmatpush.msra.mxu0 0.0
          %753 = vmatpush.msra.mxu0 0.0
          %v754 = vand.u32 %v474, 4294901760
          %755 = vmatpush.msra.mxu0 %v754
          %v756 = vand.u32 %v661, 4294901760
          %v757 = vsub.f32 %v661, %v756
          %v758 = vand.u32 %v757, 4294901760
          %759 = vmatmul.f32.gmra.mxu0 %v758
          %v760 = vpop.f32.mrf.mxu0
          %v761 = vadd.f32 %v737, %v760
          %762 = vdwg.mxu0
          %763 = vmatpush.msra.mxu0 0.0
          %764 = vmatpush.msra.mxu0 0.0
          %765 = vmatpush.msra.mxu0 0.0
          %766 = vmatpush.msra.mxu0 0.0
          %767 = vmatpush.msra.mxu0 0.0
          %768 = vmatpush.msra.mxu0 0.0
          %769 = vmatpush.msra.mxu0 0.0
          %770 = vmatpush.msra.mxu0 0.0
          %771 = vmatpush.msra.mxu0 0.0
          %772 = vmatpush.msra.mxu0 0.0
          %773 = vmatpush.msra.mxu0 0.0
          %774 = vmatpush.msra.mxu0 0.0
          %775 = vmatpush.msra.mxu0 0.0
          %776 = vmatpush.msra.mxu0 0.0
          %777 = vmatpush.msra.mxu0 0.0
          %v778 = vand.u32 %v474, 4294901760
          %v779 = vsub.f32 %v474, %v778
          %v780 = vand.u32 %v779, 4294901760
          %781 = vmatpush.msra.mxu0 %v780
          %v782 = vand.u32 %v661, 4294901760
          %783 = vmatmul.f32.gmra.mxu0 %v782
          %v784 = vpop.f32.mrf.mxu0
          %v785 = vadd.f32 %v761, %v784
          %786 = vdwg.mxu0
          %787 = vmatpush.msra.mxu0 0.0
          %788 = vmatpush.msra.mxu0 0.0
          %789 = vmatpush.msra.mxu0 0.0
          %790 = vmatpush.msra.mxu0 0.0
          %791 = vmatpush.msra.mxu0 0.0
          %792 = vmatpush.msra.mxu0 0.0
          %793 = vmatpush.msra.mxu0 0.0
          %794 = vmatpush.msra.mxu0 0.0
          %795 = vmatpush.msra.mxu0 0.0
          %796 = vmatpush.msra.mxu0 0.0
          %797 = vmatpush.msra.mxu0 0.0
          %798 = vmatpush.msra.mxu0 0.0
          %799 = vmatpush.msra.mxu0 0.0
          %800 = vmatpush.msra.mxu0 0.0
          %801 = vmatpush.msra.mxu0 0.0
          %v802 = vand.u32 %v474, 4294901760
          %803 = vmatpush.msra.mxu0 %v802
          %v804 = vand.u32 %v661, 4294901760
          %805 = vmatmul.f32.gmra.mxu0 %v804
          %v806 = vpop.f32.mrf.mxu0
          %v807 = vadd.f32 %v785, %v806
          %808 = vdwg.mxu0
          %v809 = vadd.f32 %v659, %v807
          %810 = vst.msk [vmem:[#allocation4] sm:$0xff] %vm475, %v809
          %811 = vst.msk [vmem:[#allocation2] sm:$0xff] %vm651, %v633
          %s812 = scalar_lea.vmem %s369, 8 [#allocation8]
          %v813 = vld [vmem:[%s812] sm:$0xff]
          %s814 = scalar_lea.vmem %s379, 8 [#allocation11]
          %v815 = vld [vmem:[%s814] sm:$0xff]
          %s816 = scalar_lea.vmem %s389, 8 [#allocation13]
          %v817 = vld [vmem:[%s816] sm:$0xff]
          %v819 = vsel %vm475, %v813, 0
          %v822 = vsel %vm475, %v815, 0
          %824 = vmatpush.xpose.msra.mxu0 0.0
          %825 = vmatpush.xpose.msra.mxu0 0.0
          %826 = vmatpush.xpose.msra.mxu0 0.0
          %827 = vmatpush.xpose.msra.mxu0 0.0
          %828 = vmatpush.xpose.msra.mxu0 0.0
          %829 = vmatpush.xpose.msra.mxu0 0.0
          %830 = vmatpush.xpose.msra.mxu0 0.0
          %831 = vmatpush.xpose.msra.mxu0 0.0
          %832 = vmatpush.xpose.msra.mxu0 0.0
          %833 = vmatpush.xpose.msra.mxu0 0.0
          %834 = vmatpush.xpose.msra.mxu0 0.0
          %835 = vmatpush.xpose.msra.mxu0 0.0
          %836 = vmatpush.xpose.msra.mxu0 0.0
          %837 = vmatpush.xpose.msra.mxu0 0.0
          %838 = vmatpush.xpose.msra.mxu0 0.0
          %v839 = vand.u32 %v822, 4294901760
          %840 = vmatpush.xpose.msra.mxu0 %v839
          %v841 = vand.u32 %v819, 4294901760
          %v842 = vsub.f32 %v819, %v841
          %v843 = vand.u32 %v842, 4294901760
          %v844 = vsub.f32 %v842, %v843
          %v845 = vand.u32 %v844, 4294901760
          %846 = vmatmul.f32.gmra.mxu0 %v845
          %v847 = vpop.f32.mrf.mxu0
          %v848 = vadd.f32 %v471, %v847
          %849 = vdwg.mxu0
          %850 = vmatpush.xpose.msra.mxu0 0.0
          %851 = vmatpush.xpose.msra.mxu0 0.0
          %852 = vmatpush.xpose.msra.mxu0 0.0
          %853 = vmatpush.xpose.msra.mxu0 0.0
          %854 = vmatpush.xpose.msra.mxu0 0.0
          %855 = vmatpush.xpose.msra.mxu0 0.0
          %856 = vmatpush.xpose.msra.mxu0 0.0
          %857 = vmatpush.xpose.msra.mxu0 0.0
          %858 = vmatpush.xpose.msra.mxu0 0.0
          %859 = vmatpush.xpose.msra.mxu0 0.0
          %860 = vmatpush.xpose.msra.mxu0 0.0
          %861 = vmatpush.xpose.msra.mxu0 0.0
          %862 = vmatpush.xpose.msra.mxu0 0.0
          %863 = vmatpush.xpose.msra.mxu0 0.0
          %864 = vmatpush.xpose.msra.mxu0 0.0
          %v865 = vand.u32 %v822, 4294901760
          %v866 = vsub.f32 %v822, %v865
          %v867 = vand.u32 %v866, 4294901760
          %v868 = vsub.f32 %v866, %v867
          %v869 = vand.u32 %v868, 4294901760
          %870 = vmatpush.xpose.msra.mxu0 %v869
          %v871 = vand.u32 %v819, 4294901760
          %872 = vmatmul.f32.gmra.mxu0 %v871
          %v873 = vpop.f32.mrf.mxu0
          %v874 = vadd.f32 %v848, %v873
          %875 = vdwg.mxu0
          %876 = vmatpush.xpose.msra.mxu0 0.0
          %877 = vmatpush.xpose.msra.mxu0 0.0
          %878 = vmatpush.xpose.msra.mxu0 0.0
          %879 = vmatpush.xpose.msra.mxu0 0.0
          %880 = vmatpush.xpose.msra.mxu0 0.0
          %881 = vmatpush.xpose.msra.mxu0 0.0
          %882 = vmatpush.xpose.msra.mxu0 0.0
          %883 = vmatpush.xpose.msra.mxu0 0.0
          %884 = vmatpush.xpose.msra.mxu0 0.0
          %885 = vmatpush.xpose.msra.mxu0 0.0
          %886 = vmatpush.xpose.msra.mxu0 0.0
          %887 = vmatpush.xpose.msra.mxu0 0.0
          %888 = vmatpush.xpose.msra.mxu0 0.0
          %889 = vmatpush.xpose.msra.mxu0 0.0
          %890 = vmatpush.xpose.msra.mxu0 0.0
          %v891 = vand.u32 %v822, 4294901760
          %v892 = vsub.f32 %v822, %v891
          %893 = vmatpush.xpose.msra.mxu0 %v892
          %v894 = vand.u32 %v819, 4294901760
          %v895 = vsub.f32 %v819, %v894
          %896 = vmatmul.f32.gmra.mxu0 %v895
          %v897 = vpop.f32.mrf.mxu0
          %v898 = vadd.f32 %v874, %v897
          %899 = vdwg.mxu0
          %900 = vmatpush.xpose.msra.mxu0 0.0
          %901 = vmatpush.xpose.msra.mxu0 0.0
          %902 = vmatpush.xpose.msra.mxu0 0.0
          %903 = vmatpush.xpose.msra.mxu0 0.0
          %904 = vmatpush.xpose.msra.mxu0 0.0
          %905 = vmatpush.xpose.msra.mxu0 0.0
          %906 = vmatpush.xpose.msra.mxu0 0.0
          %907 = vmatpush.xpose.msra.mxu0 0.0
          %908 = vmatpush.xpose.msra.mxu0 0.0
          %909 = vmatpush.xpose.msra.mxu0 0.0
          %910 = vmatpush.xpose.msra.mxu0 0.0
          %911 = vmatpush.xpose.msra.mxu0 0.0
          %912 = vmatpush.xpose.msra.mxu0 0.0
          %913 = vmatpush.xpose.msra.mxu0 0.0
          %914 = vmatpush.xpose.msra.mxu0 0.0
          %v915 = vand.u32 %v822, 4294901760
          %916 = vmatpush.xpose.msra.mxu0 %v915
          %v917 = vand.u32 %v819, 4294901760
          %v918 = vsub.f32 %v819, %v917
          %v919 = vand.u32 %v918, 4294901760
          %920 = vmatmul.f32.gmra.mxu0 %v919
          %v921 = vpop.f32.mrf.mxu0
          %v922 = vadd.f32 %v898, %v921
          %923 = vdwg.mxu0
          %924 = vmatpush.xpose.msra.mxu0 0.0
          %925 = vmatpush.xpose.msra.mxu0 0.0
          %926 = vmatpush.xpose.msra.mxu0 0.0
          %927 = vmatpush.xpose.msra.mxu0 0.0
          %928 = vmatpush.xpose.msra.mxu0 0.0
          %929 = vmatpush.xpose.msra.mxu0 0.0
          %930 = vmatpush.xpose.msra.mxu0 0.0
          %931 = vmatpush.xpose.msra.mxu0 0.0
          %932 = vmatpush.xpose.msra.mxu0 0.0
          %933 = vmatpush.xpose.msra.mxu0 0.0
          %934 = vmatpush.xpose.msra.mxu0 0.0
          %935 = vmatpush.xpose.msra.mxu0 0.0
          %936 = vmatpush.xpose.msra.mxu0 0.0
          %937 = vmatpush.xpose.msra.mxu0 0.0
          %938 = vmatpush.xpose.msra.mxu0 0.0
          %v939 = vand.u32 %v822, 4294901760
          %v940 = vsub.f32 %v822, %v939
          %v941 = vand.u32 %v940, 4294901760
          %942 = vmatpush.xpose.msra.mxu0 %v941
          %v943 = vand.u32 %v819, 4294901760
          %944 = vmatmul.f32.gmra.mxu0 %v943
          %v945 = vpop.f32.mrf.mxu0
          %v946 = vadd.f32 %v922, %v945
          %947 = vdwg.mxu0
          %948 = vmatpush.xpose.msra.mxu0 0.0
          %949 = vmatpush.xpose.msra.mxu0 0.0
          %950 = vmatpush.xpose.msra.mxu0 0.0
          %951 = vmatpush.xpose.msra.mxu0 0.0
          %952 = vmatpush.xpose.msra.mxu0 0.0
          %953 = vmatpush.xpose.msra.mxu0 0.0
          %954 = vmatpush.xpose.msra.mxu0 0.0
          %955 = vmatpush.xpose.msra.mxu0 0.0
          %956 = vmatpush.xpose.msra.mxu0 0.0
          %957 = vmatpush.xpose.msra.mxu0 0.0
          %958 = vmatpush.xpose.msra.mxu0 0.0
          %959 = vmatpush.xpose.msra.mxu0 0.0
          %960 = vmatpush.xpose.msra.mxu0 0.0
          %961 = vmatpush.xpose.msra.mxu0 0.0
          %962 = vmatpush.xpose.msra.mxu0 0.0
          %v963 = vand.u32 %v822, 4294901760
          %964 = vmatpush.xpose.msra.mxu0 %v963
          %v965 = vand.u32 %v819, 4294901760
          %966 = vmatmul.f32.gmra.mxu0 %v965
          %v967 = vpop.f32.mrf.mxu0
          %v968 = vadd.f32 %v946, %v967
          %969 = vdwg.mxu0
          %s970 = scalar_lea.vmem [#allocation2], 8
          %v971 = vld [vmem:[%s970] sm:$0xff]
          %v972 = vsel %vm629, %v968, -inf
          %973 = vmax.xlane.f32.xlu0 %v972
          %v974 = vpop.xlane.xlu0 %973
          %v975 = vmax.f32 %v971, %v974
          %v976 = vsub.f32 %v971, %v975
          %v977 = vmul.f32 %v976, 1.442695
          %v978 = vpow.pop %v977
          %980 = vset.pattern.permute.xlu0 0
          %981 = vperm.xlu0 %980, %v975
          %v982 = vpop.permute.xlu0 %981
          %v984 = vsub.f32 %v968, %v982
          %v985 = vmul.f32 %v984, 1.442695
          %v986 = vpow.pop %v985
          %s987 = scalar_lea.vmem [#allocation3], 8
          %v988 = vld [vmem:[%s987] sm:$0xff]
          %v989 = vmul.f32 %v978, %v988
          %v990 = vsel %vm629, %v986, 0.0
          %991 = vadd.xlane.f32.xlu0 %v990
          %v992 = vpop.xlane.xlu0 %991
          %v993 = vadd.f32 %v989, %v992
          %994 = vst.msk [vmem:[%s987] sm:$0xff] %vm651, %v993
          %s995 = scalar_lea.vmem [#allocation4], 8
          %v996 = vld [vmem:[%s995] sm:$0xff]
          %998 = vset.pattern.permute.xlu0 0
          %999 = vperm.xlu0 %998, %v978
          %v1000 = vpop.permute.xlu0 %999
          %v1002 = vmul.f32 %v1000, %v996
          %v1004 = vsel %vm629, %v986, 0
          %1006 = vmatpush.msra.mxu0 0.0
          %1007 = vmatpush.msra.mxu0 0.0
          %1008 = vmatpush.msra.mxu0 0.0
          %1009 = vmatpush.msra.mxu0 0.0
          %1010 = vmatpush.msra.mxu0 0.0
          %1011 = vmatpush.msra.mxu0 0.0
          %1012 = vmatpush.msra.mxu0 0.0
          %1013 = vmatpush.msra.mxu0 0.0
          %1014 = vmatpush.msra.mxu0 0.0
          %1015 = vmatpush.msra.mxu0 0.0
          %1016 = vmatpush.msra.mxu0 0.0
          %1017 = vmatpush.msra.mxu0 0.0
          %1018 = vmatpush.msra.mxu0 0.0
          %1019 = vmatpush.msra.mxu0 0.0
          %1020 = vmatpush.msra.mxu0 0.0
          %v1021 = vand.u32 %v817, 4294901760
          %1022 = vmatpush.msra.mxu0 %v1021
          %v1023 = vand.u32 %v1004, 4294901760
          %v1024 = vsub.f32 %v1004, %v1023
          %v1025 = vand.u32 %v1024, 4294901760
          %v1026 = vsub.f32 %v1024, %v1025
          %v1027 = vand.u32 %v1026, 4294901760
          %1028 = vmatmul.f32.gmra.mxu0 %v1027
          %v1029 = vpop.f32.mrf.mxu0
          %v1030 = vadd.f32 0.0, %v1029
          %1031 = vdwg.mxu0
          %1032 = vmatpush.msra.mxu0 0.0
          %1033 = vmatpush.msra.mxu0 0.0
          %1034 = vmatpush.msra.mxu0 0.0
          %1035 = vmatpush.msra.mxu0 0.0
          %1036 = vmatpush.msra.mxu0 0.0
          %1037 = vmatpush.msra.mxu0 0.0
          %1038 = vmatpush.msra.mxu0 0.0
          %1039 = vmatpush.msra.mxu0 0.0
          %1040 = vmatpush.msra.mxu0 0.0
          %1041 = vmatpush.msra.mxu0 0.0
          %1042 = vmatpush.msra.mxu0 0.0
          %1043 = vmatpush.msra.mxu0 0.0
          %1044 = vmatpush.msra.mxu0 0.0
          %1045 = vmatpush.msra.mxu0 0.0
          %1046 = vmatpush.msra.mxu0 0.0
          %v1047 = vand.u32 %v817, 4294901760
          %v1048 = vsub.f32 %v817, %v1047
          %v1049 = vand.u32 %v1048, 4294901760
          %v1050 = vsub.f32 %v1048, %v1049
          %v1051 = vand.u32 %v1050, 4294901760
          %1052 = vmatpush.msra.mxu0 %v1051
          %v1053 = vand.u32 %v1004, 4294901760
          %1054 = vmatmul.f32.gmra.mxu0 %v1053
          %v1055 = vpop.f32.mrf.mxu0
          %v1056 = vadd.f32 %v1030, %v1055
          %1057 = vdwg.mxu0
          %1058 = vmatpush.msra.mxu0 0.0
          %1059 = vmatpush.msra.mxu0 0.0
          %1060 = vmatpush.msra.mxu0 0.0
          %1061 = vmatpush.msra.mxu0 0.0
          %1062 = vmatpush.msra.mxu0 0.0
          %1063 = vmatpush.msra.mxu0 0.0
          %1064 = vmatpush.msra.mxu0 0.0
          %1065 = vmatpush.msra.mxu0 0.0
          %1066 = vmatpush.msra.mxu0 0.0
          %1067 = vmatpush.msra.mxu0 0.0
          %1068 = vmatpush.msra.mxu0 0.0
          %1069 = vmatpush.msra.mxu0 0.0
          %1070 = vmatpush.msra.mxu0 0.0
          %1071 = vmatpush.msra.mxu0 0.0
          %1072 = vmatpush.msra.mxu0 0.0
          %v1073 = vand.u32 %v817, 4294901760
          %v1074 = vsub.f32 %v817, %v1073
          %1075 = vmatpush.msra.mxu0 %v1074
          %v1076 = vand.u32 %v1004, 4294901760
          %v1077 = vsub.f32 %v1004, %v1076
          %1078 = vmatmul.f32.gmra.mxu0 %v1077
          %v1079 = vpop.f32.mrf.mxu0
          %v1080 = vadd.f32 %v1056, %v1079
          %1081 = vdwg.mxu0
          %1082 = vmatpush.msra.mxu0 0.0
          %1083 = vmatpush.msra.mxu0 0.0
          %1084 = vmatpush.msra.mxu0 0.0
          %1085 = vmatpush.msra.mxu0 0.0
          %1086 = vmatpush.msra.mxu0 0.0
          %1087 = vmatpush.msra.mxu0 0.0
          %1088 = vmatpush.msra.mxu0 0.0
          %1089 = vmatpush.msra.mxu0 0.0
          %1090 = vmatpush.msra.mxu0 0.0
          %1091 = vmatpush.msra.mxu0 0.0
          %1092 = vmatpush.msra.mxu0 0.0
          %1093 = vmatpush.msra.mxu0 0.0
          %1094 = vmatpush.msra.mxu0 0.0
          %1095 = vmatpush.msra.mxu0 0.0
          %1096 = vmatpush.msra.mxu0 0.0
          %v1097 = vand.u32 %v817, 4294901760
          %1098 = vmatpush.msra.mxu0 %v1097
          %v1099 = vand.u32 %v1004, 4294901760
          %v1100 = vsub.f32 %v1004, %v1099
          %v1101 = vand.u32 %v1100, 4294901760
          %1102 = vmatmul.f32.gmra.mxu0 %v1101
          %v1103 = vpop.f32.mrf.mxu0
          %v1104 = vadd.f32 %v1080, %v1103
          %1105 = vdwg.mxu0
          %1106 = vmatpush.msra.mxu0 0.0
          %1107 = vmatpush.msra.mxu0 0.0
          %1108 = vmatpush.msra.mxu0 0.0
          %1109 = vmatpush.msra.mxu0 0.0
          %1110 = vmatpush.msra.mxu0 0.0
          %1111 = vmatpush.msra.mxu0 0.0
          %1112 = vmatpush.msra.mxu0 0.0
          %1113 = vmatpush.msra.mxu0 0.0
          %1114 = vmatpush.msra.mxu0 0.0
          %1115 = vmatpush.msra.mxu0 0.0
          %1116 = vmatpush.msra.mxu0 0.0
          %1117 = vmatpush.msra.mxu0 0.0
          %1118 = vmatpush.msra.mxu0 0.0
          %1119 = vmatpush.msra.mxu0 0.0
          %1120 = vmatpush.msra.mxu0 0.0
          %v1121 = vand.u32 %v817, 4294901760
          %v1122 = vsub.f32 %v817, %v1121
          %v1123 = vand.u32 %v1122, 4294901760
          %1124 = vmatpush.msra.mxu0 %v1123
          %v1125 = vand.u32 %v1004, 4294901760
          %1126 = vmatmul.f32.gmra.mxu0 %v1125
          %v1127 = vpop.f32.mrf.mxu0
          %v1128 = vadd.f32 %v1104, %v1127
          %1129 = vdwg.mxu0
          %1130 = vmatpush.msra.mxu0 0.0
          %1131 = vmatpush.msra.mxu0 0.0
          %1132 = vmatpush.msra.mxu0 0.0
          %1133 = vmatpush.msra.mxu0 0.0
          %1134 = vmatpush.msra.mxu0 0.0
          %1135 = vmatpush.msra.mxu0 0.0
          %1136 = vmatpush.msra.mxu0 0.0
          %1137 = vmatpush.msra.mxu0 0.0
          %1138 = vmatpush.msra.mxu0 0.0
          %1139 = vmatpush.msra.mxu0 0.0
          %1140 = vmatpush.msra.mxu0 0.0
          %1141 = vmatpush.msra.mxu0 0.0
          %1142 = vmatpush.msra.mxu0 0.0
          %1143 = vmatpush.msra.mxu0 0.0
          %1144 = vmatpush.msra.mxu0 0.0
          %v1145 = vand.u32 %v817, 4294901760
          %1146 = vmatpush.msra.mxu0 %v1145
          %v1147 = vand.u32 %v1004, 4294901760
          %1148 = vmatmul.f32.gmra.mxu0 %v1147
          %v1149 = vpop.f32.mrf.mxu0
          %v1150 = vadd.f32 %v1128, %v1149
          %1151 = vdwg.mxu0
          %v1152 = vadd.f32 %v1002, %v1150
          %1153 = vst.msk [vmem:[%s995] sm:$0xff] %vm475, %v1152
          %1154 = vst.msk [vmem:[%s970] sm:$0xff] %vm651, %v975
        $region60: #{tpu_custom_call.1} parent=35 // pred_fallthru
          _
        // Predicated region
        $region61: #{tpu_custom_call.1} parent=35 // pred_check
          %p1155 = pneg %p454
        $region62: #{tpu_custom_call.1} parent=35 // pred_check_branch
          %1157 = sbr.rel (%p1155) target = $region64
        $region63: #{tpu_custom_call.1} parent=35 // pred_region
          %v1158 = vld [vmem:[#allocation3] sm:$0xff]
          %v1159 = vld [vmem:[#allocation3 + $0x8] sm:$0xff]
          %v1160 = vrcp.pop %v1158
          %v1161 = vrcp.pop %v1159
          %v1162 = vld [vmem:[#allocation4] sm:$0xff]
          %v1163 = vld [vmem:[#allocation4 + $0x8] sm:$0xff]
          %1165 = vset.pattern.permute.xlu0 0
          %1166 = vperm.xlu0 %1165, %v1160
          %v1167 = vpop.permute.xlu0 %1166
          %1170 = vset.pattern.permute.xlu0 0
          %1171 = vperm.xlu0 %1170, %v1161
          %v1172 = vpop.permute.xlu0 %1171
          %v1174 = vmul.f32 %v1162, %v1167
          %v1175 = vmul.f32 %v1163, %v1172
          %vm1176 = vcmask 130048
          %1177 = vst.msk [vmem:[%s429] sm:$0xff] %vm1176, %v1174
          %1178 = vst.msk [vmem:[%s429 + $0x8] sm:$0xff] %vm1176, %v1175
        $region64: #{tpu_custom_call.1} parent=35 // pred_fallthru
          _
        %s1179 = sand.u32 %s218, 1
        %s1180 = scalar_lea.sflag [#allocation10], %s1179
        %s1181 = sand.u32 %s218, 1
        %s1182 = smul.addr %s1181, 16
        %s1183 = scalar_lea.vmem [#allocation16], %s1182
        // Predicated region
        $region65: #{tpu_custom_call.1} parent=35 // pred_check
          %p1184 = pneg %p228
        $region66: #{tpu_custom_call.1} parent=35 // pred_check_branch
          %1186 = sbr.rel (%p1184) target = $region68
        $region67: #{tpu_custom_call.1} parent=35 // pred_region
          %1188 = vsyncadd %s1180, 0
          %s1189 = smul.addr %s34, 2
          %s1190 = sadd.s32 %s35, %s1189
          %s1191 = smul.addr %s1190, 8
          %s1192 = scalar_lea.hbm %s6, %s1191
          %s1193 = sshll.u32 %s1183, 4
          %s1194 = int_to_ptr.vmem [resolvable:$true] %s1193
          %s1195 = sshll.u32 %s1192, 4
          %s1196 = int_to_ptr.hbm [resolvable:$true] %s1195
          %1201 = dma.vmem_to_hbm [thread:$0]  %s1194, 256, %s1196, %s1180, 128, 128, 8
        $region68: #{tpu_custom_call.1} parent=35 // pred_fallthru
          _
      $region36: #{tpu_custom_call.1} parent=5 // pred_fallthru
        _
      %p1202 = scmp.le.s32.totalorder 2, %s24
      // Predicated region
      $region69: #{tpu_custom_call.1} parent=5 // pred_check
        %p1203 = pneg %p1202
      $region70: #{tpu_custom_call.1} parent=5 // pred_check_branch
        %1205 = sbr.rel (%p1203) target = $region72
      $region71: #{tpu_custom_call.1} parent=5 // pred_region
        %s1206 = ssub.s32 %s24, 2
        // Predicated region
        $region73: #{tpu_custom_call.1} parent=71 // pred_check
          %p1207 = pneg %p234
        $region74: #{tpu_custom_call.1} parent=71 // pred_check_branch
          %1209 = sbr.rel (%p1207) target = $region76
        $region75: #{tpu_custom_call.1} parent=71 // pred_region
          %s1210 = sand.u32 %s219, 1
          %s1211 = scalar_lea.sflag [#allocation10], %s1210
          %s1212 = sand.u32 %s219, 1
          %s1213 = smul.addr %s1212, 16
          %s1214 = scalar_lea.vmem [#allocation16], %s1213
          %1216 = dma.done %s1211, 256
        $region76: #{tpu_custom_call.1} parent=71 // pred_fallthru
          _
      $region72: #{tpu_custom_call.1} parent=5 // pred_fallthru
        _
    $region6: #{tpu_custom_call.1} parent=1 // loop_footer
      %s28 = sadd.s32 1, %s24
    $region7: #{tpu_custom_call.1} parent=1 // loop_footer_branch
      %23 = sbr.rel target = $region3
    $region8: #{tpu_custom_call.1} parent=1 // loop_exit
      _
    %1217 = vsyncpa [#allocation9], 1
    %s1218 = scalar_lea.sflag [#allocation9], 1
    %1219 = vsyncpa %s1218, 1
    %1220 = vsyncpa [#allocation12], 1
    %s1221 = scalar_lea.sflag [#allocation12], 1
    %1222 = vsyncpa %s1221, 1
    %1223 = vsyncpa [#allocation15], 1
    %1224 = vsyncpa [#allocation10], 1
    %s1225 = scalar_lea.sflag [#allocation10], 1
    %1226 = vsyncpa %s1225, 1

</llo_original>
